<compile_context>
chip_gen: v7x
topology: tpu7x:2x2x1
jax: 0.10.0
libtpu: 0.0.40
codegen_flags: <defaults>
</compile_context>

<pallas_src>
import jax
import jax.numpy as jnp
from jax.experimental import pallas as pl
from jax.experimental.pallas import tpu as pltpu

EMBEDDING_K = 32
NUM_USERS = 16
NUM_ITEMS = 16
BATCH = 8

# Per-tower layer dims (PyTorch): 64 -> 360 -> 200 -> 80 -> 2 -> 1
D_IN = 2 * EMBEDDING_K
H1, H2, H3, H4 = 360, 200, 80, 2
LAYER_DIMS = [D_IN, H1, H2, H3, H4, 1]
NUM_LAYERS = len(LAYER_DIMS) - 1  # 5

# Per-tower lane-padded widths (multiples of 128).
P1, P2, P3 = 384, 256, 128

W0_COLS = 2 * P1   # 768 : [cvr | ctr] layer-0 outputs
W1_COLS = 2 * P2   # 512 : block-diagonal layer-1 outputs
W2_COLS = 2 * P3   # 256 : block-diagonal layer-2 outputs
W3_COLS = 128      # merged layer-3 outputs (lanes 0,1 = cvr ; 2,3 = ctr)
OUT_COLS = 128     # lane-dense output (cols 0,1,2 used)

# Offsets into the packed bias slab.
B0_OFF = 0
B1_OFF = B0_OFF + W0_COLS        # 768
B2_OFF = B1_OFF + W1_COLS        # 1280
B3_OFF = B2_OFF + W2_COLS        # 1536
B4_OFF = B3_OFF + W3_COLS        # 1664
BIAS_WIDTH = B4_OFF + 128        # 1792 (last 128 lanes: layer-4 biases)


def esmm_kernel(x_ref, tab_ref, w0_ref, w1_ref, w2_ref, w3_ref,
                bias_ref, w4_ref, out_ref):
    f32 = jnp.float32
    bf16 = jnp.bfloat16
    bsz = x_ref.shape[0]

    # ---- fused embedding gather + concat: one-hot @ packed table (exact) ----
    idx = x_ref[...]                                       # (B, 2) int32
    user = idx[:, 0:1]
    item = idx[:, 1:2]
    col = jax.lax.broadcasted_iota(jnp.int32, (bsz, NUM_USERS + NUM_ITEMS), 1)
    onehot = jnp.logical_or(col == user, col == item + NUM_USERS).astype(f32)
    z = jnp.dot(onehot, tab_ref[...], preferred_element_type=f32)   # (B, 64) f32

    bias = bias_ref[...]                                   # (B, 1792) f32

    # ---- merged MLP towers on the MXU (bf16 weights, f32 accumulation) ----
    h = jnp.dot(z.astype(bf16), w0_ref[...], preferred_element_type=f32)
    h = jnp.maximum(h + bias[:, B0_OFF:B0_OFF + W0_COLS], 0.0)       # (B, 768)
    h = jnp.dot(h.astype(bf16), w1_ref[...], preferred_element_type=f32)
    h = jnp.maximum(h + bias[:, B1_OFF:B1_OFF + W1_COLS], 0.0)       # (B, 512)
    h = jnp.dot(h.astype(bf16), w2_ref[...], preferred_element_type=f32)
    h = jnp.maximum(h + bias[:, B2_OFF:B2_OFF + W2_COLS], 0.0)       # (B, 256)
    h = jnp.dot(h.astype(bf16), w3_ref[...], preferred_element_type=f32)
    h3 = jnp.maximum(h + bias[:, B3_OFF:B3_OFF + W3_COLS], 0.0)      # (B, 128)

    # ---- layer 4 (2 -> 1, both towers) on the VPU: masked mul + lane reduce ----
    w4 = w4_ref[...]                                       # (8, 128) f32, rows 0/1 used
    b4 = bias[:, B4_OFF:B4_OFF + 128]                      # lane 0 = cvr bias, lane 1 = ctr
    pre_cvr = jnp.sum(h3 * w4[0:1, :], axis=-1, keepdims=True) + b4[:, 0:1]
    pre_ctr = jnp.sum(h3 * w4[1:2, :], axis=-1, keepdims=True) + b4[:, 1:2]
    ctcvr = jax.nn.sigmoid(pre_ctr) * jax.nn.sigmoid(pre_cvr)

    # ---- single lane-dense store: col 0 = cvr, col 1 = ctr, col 2 = ctcvr ----
    lane = jax.lax.broadcasted_iota(jnp.int32, (1, OUT_COLS), 1)
    out_ref[...] = (jnp.where(lane == 0, pre_cvr, 0.0)
                    + jnp.where(lane == 1, pre_ctr, 0.0)
                    + jnp.where(lane == 2, ctcvr, 0.0))


def _esmm_forward(x, packed):
    bsz = x.shape[0]
    assert bsz == packed["bias"].shape[0], "batch must match packed bias slab"

    args = (x.astype(jnp.int32), packed["tab"], packed["w0"], packed["w1"],
            packed["w2"], packed["w3"], packed["bias"], packed["w4"])

    vmem = pl.BlockSpec(memory_space=pltpu.MemorySpace.VMEM)
    flops = 2 * bsz * ((NUM_USERS + NUM_ITEMS) * D_IN + D_IN * W0_COLS
                       + W0_COLS * W1_COLS + W1_COLS * W2_COLS
                       + W2_COLS * W3_COLS + W3_COLS)
    bytes_accessed = (sum(int(a.size) * a.dtype.itemsize for a in args)
                      + bsz * OUT_COLS * 4)

    out = pl.pallas_call(
        esmm_kernel,
        out_shape=jax.ShapeDtypeStruct((bsz, OUT_COLS), jnp.float32),
        in_specs=[vmem] * len(args),
        out_specs=vmem,
        cost_estimate=pl.CostEstimate(flops=flops, transcendentals=2 * bsz,
                                      bytes_accessed=bytes_accessed),
    )(*args)
    return out[:, 0:1], out[:, 1:2], out[:, 2:3]


esmm_forward = jax.jit(_esmm_forward)


def init_params(key):
    """PyTorch-like init: N(0,1) embeddings, U(+/-1/sqrt(fan_in)) linear.
    Linear weights stored transposed vs PyTorch, i.e. (fan_in, fan_out)."""
    keys = jax.random.split(key, 2 + 4 * NUM_LAYERS)
    params = {
        "user_embedding": jax.random.normal(keys[0], (NUM_USERS, EMBEDDING_K), jnp.float32),
        "item_embedding": jax.random.normal(keys[1], (NUM_ITEMS, EMBEDDING_K), jnp.float32),
    }
    k = 2
    for tower in ("cvr", "ctr"):
        ws, bs = [], []
        for i in range(NUM_LAYERS):
            fan_in, fan_out = LAYER_DIMS[i], LAYER_DIMS[i + 1]
            bound = 1.0 / (fan_in ** 0.5)
            w = jax.random.uniform(keys[k], (fan_in, fan_out), jnp.float32, -bound, bound)
            b = jax.random.uniform(keys[k + 1], (1, fan_out), jnp.float32, -bound, bound)
            ws.append(w)
            bs.append(b)
            k += 2
        params[f"{tower}_w"] = tuple(ws)
        params[f"{tower}_b"] = tuple(bs)
    return params


def pack_params(params, batch):
    """Build the padded / merged / bf16 operands consumed by the kernel."""
    f32 = jnp.float32
    cw, cb = params["cvr_w"], params["cvr_b"]
    tw, tb = params["ctr_w"], params["ctr_b"]

    # Packed embedding table: rows 0:16 -> [user | 0], rows 16:32 -> [0 | item].
    tab = jnp.zeros((NUM_USERS + NUM_ITEMS, D_IN), f32)
    tab = tab.at[:NUM_USERS, :EMBEDDING_K].set(params["user_embedding"])
    tab = tab.at[NUM_USERS:, EMBEDDING_K:].set(params["item_embedding"])

    # Layer 0: shared input, concatenated tower outputs.
    w0 = jnp.zeros((D_IN, W0_COLS), f32)
    w0 = w0.at[:, 0:H1].set(cw[0])
    w0 = w0.at[:, P1:P1 + H1].set(tw[0])

    # Layers 1-2: block-diagonal (towers stay merged, cross blocks are zero).
    w1 = jnp.zeros((W0_COLS, W1_COLS), f32)
    w1 = w1.at[0:H1, 0:H2].set(cw[1])
    w1 = w1.at[P1:P1 + H1, P2:P2 + H2].set(tw[1])

    w2 = jnp.zeros((W1_COLS, W2_COLS), f32)
    w2 = w2.at[0:H2, 0:H3].set(cw[2])
    w2 = w2.at[P2:P2 + H2, P3:P3 + H3].set(tw[2])

    # Layer 3 (80 -> 2, both towers) as one thin matmul: cols 0,1 cvr / 2,3 ctr.
    w3 = jnp.zeros((W2_COLS, W3_COLS), f32)
    w3 = w3.at[0:H3, 0:2].set(cw[3])
    w3 = w3.at[P3:P3 + H3, 2:4].set(tw[3])

    # Layer 4 (2 -> 1) as VPU rows: row 0 = cvr weights (lanes 0:2), row 1 = ctr (lanes 2:4).
    w4 = jnp.zeros((8, W3_COLS), f32)
    w4 = w4.at[0, 0:2].set(cw[4][:, 0])
    w4 = w4.at[1, 2:4].set(tw[4][:, 0])

    # All biases in one pre-broadcast f32 slab (padding lanes stay zero).
    bias = jnp.zeros((1, BIAS_WIDTH), f32)
    bias = bias.at[:, B0_OFF:B0_OFF + H1].set(cb[0])
    bias = bias.at[:, B0_OFF + P1:B0_OFF + P1 + H1].set(tb[0])
    bias = bias.at[:, B1_OFF:B1_OFF + H2].set(cb[1])
    bias = bias.at[:, B1_OFF + P2:B1_OFF + P2 + H2].set(tb[1])
    bias = bias.at[:, B2_OFF:B2_OFF + H3].set(cb[2])
    bias = bias.at[:, B2_OFF + P3:B2_OFF + P3 + H3].set(tb[2])
    bias = bias.at[:, B3_OFF:B3_OFF + 2].set(cb[3])
    bias = bias.at[:, B3_OFF + 2:B3_OFF + 4].set(tb[3])
    bias = bias.at[:, B4_OFF:B4_OFF + 1].set(cb[4])
    bias = bias.at[:, B4_OFF + 1:B4_OFF + 2].set(tb[4])
    bias = jnp.broadcast_to(bias, (batch, BIAS_WIDTH))

    bf16 = jnp.bfloat16
    return {
        "tab": tab,
        "w0": w0.astype(bf16),
        "w1": w1.astype(bf16),
        "w2": w2.astype(bf16),
        "w3": w3.astype(bf16),
        "w4": w4,
        "bias": bias,
    }


def esmm_reference(x, params):
    """Pure-JAX reference mirroring the kernel's precision (bf16 MXU layers,
    f32 tail). The block-diag / one-hot packing is mathematically exact, so
    this also matches the original f32 module up to bf16 rounding."""
    u = jnp.take(params["user_embedding"], x[:, 0], axis=0)
    it = jnp.take(params["item_embedding"], x[:, 1], axis=0)
    z = jnp.concatenate([u, it], axis=1).astype(jnp.float32)

    def tower(ws, bs):
        h = z
        for l in range(NUM_LAYERS - 1):   # layers 0..3: bf16 dot + bias + ReLU
            h = jnp.dot(h.astype(jnp.bfloat16), ws[l].astype(jnp.bfloat16),
                        preferred_element_type=jnp.float32) + bs[l]
            h = jnp.maximum(h, 0.0)
        return jnp.dot(h, ws[-1]) + bs[-1]   # layer 4 in f32 (VPU in the kernel)

    out_cvr = tower(params["cvr_w"], params["cvr_b"])
    out_ctr = tower(params["ctr_w"], params["ctr_b"])
    out_ctcvr = jax.nn.sigmoid(out_ctr) * jax.nn.sigmoid(out_cvr)
    return out_cvr, out_ctr, out_ctcvr


if __name__ == "__main__":
    key = jax.random.PRNGKey(0)
    pkey, xkey = jax.random.split(key)
    params = init_params(pkey)
    packed = pack_params(params, BATCH)

    user_ids = jax.random.randint(xkey, (BATCH, 1), 0, NUM_USERS, dtype=jnp.int32)
    item_ids = jax.random.randint(jax.random.fold_in(xkey, 1), (BATCH, 1), 0, NUM_ITEMS,
                                  dtype=jnp.int32)
    x = jnp.concatenate([user_ids, item_ids], axis=1)   # (B, 2) int32

    out_cvr, out_ctr, out_ctcvr = jax.block_until_ready(esmm_forward(x, packed))

    ref_cvr, ref_ctr, ref_ctcvr = esmm_reference(x, params)
    assert jnp.allclose(out_cvr, ref_cvr, atol=2e-3, rtol=2e-3)
    assert jnp.allclose(out_ctr, ref_ctr, atol=2e-3, rtol=2e-3)
    assert jnp.allclose(out_ctcvr, ref_ctcvr, atol=2e-3, rtol=2e-3)

    print("KERNEL_OK")
</pallas_src>

<mosaic_0001>
module attributes {stable_mosaic.version = 11 : i64} {
  func.func @esmm_kernel(%arg0: memref<8x2xi32, #tpu.memory_space<vmem>>, %arg1: memref<32x64xf32, #tpu.memory_space<vmem>>, %arg2: memref<64x768xbf16, #tpu.memory_space<vmem>>, %arg3: memref<768x512xbf16, #tpu.memory_space<vmem>>, %arg4: memref<512x256xbf16, #tpu.memory_space<vmem>>, %arg5: memref<256x128xbf16, #tpu.memory_space<vmem>>, %arg6: memref<8x1792xf32, #tpu.memory_space<vmem>>, %arg7: memref<8x128xf32, #tpu.memory_space<vmem>>, %arg8: memref<8x128xf32, #tpu.memory_space<vmem>>) attributes {dimension_semantics = [], scalar_prefetch = 0 : i64, scratch_operands = 0 : i64, tpu.core_type = #tpu.core_type<tc>} {
    %c0 = arith.constant 0 : index
    %c0_0 = arith.constant 0 : index
    %0 = vector.load %arg0[%c0, %c0_0] : memref<8x2xi32, #tpu.memory_space<vmem>>, vector<8x2xi32>
    %1 = vector.extract_strided_slice %0 {offsets = [0, 0], sizes = [8, 1], strides = [1, 1]} : vector<8x2xi32> to vector<8x1xi32>
    %2 = vector.extract_strided_slice %0 {offsets = [0, 1], sizes = [8, 1], strides = [1, 1]} : vector<8x2xi32> to vector<8x1xi32>
    %3 = tpu.iota {dimensions = array<i32: 1>} : vector<8x32xi32>
    %4 = vector.broadcast %1 : vector<8x1xi32> to vector<8x32xi32>
    %5 = arith.cmpi eq, %3, %4 : vector<8x32xi32>
    %c16_i32 = arith.constant 16 : i32
    %6 = vector.broadcast %c16_i32 : i32 to vector<8x1xi32>
    %7 = arith.addi %2, %6 : vector<8x1xi32>
    %8 = vector.broadcast %7 : vector<8x1xi32> to vector<8x32xi32>
    %9 = arith.cmpi eq, %3, %8 : vector<8x32xi32>
    %10 = arith.ori %5, %9 : vector<8x32xi1>
    %11 = arith.extui %10 : vector<8x32xi1> to vector<8x32xi32>
    %12 = arith.sitofp %11 : vector<8x32xi32> to vector<8x32xf32>
    %c0_1 = arith.constant 0 : index
    %c0_2 = arith.constant 0 : index
    %13 = vector.load %arg1[%c0_1, %c0_2] : memref<32x64xf32, #tpu.memory_space<vmem>>, vector<32x64xf32>
    %cst = arith.constant dense<0.000000e+00> : vector<8x64xf32>
    %14 = tpu.matmul %12, %13, %cst {dimension_numbers = #tpu.dot_dimension_numbers<[1], [0], [0], [1], [0, 0, 1, 1], [], []>} : vector<8x32xf32>, vector<32x64xf32>, vector<8x64xf32> -> vector<8x64xf32>
    %c0_3 = arith.constant 0 : index
    %c0_4 = arith.constant 0 : index
    %15 = vector.load %arg6[%c0_3, %c0_4] : memref<8x1792xf32, #tpu.memory_space<vmem>>, vector<8x1792xf32>
    %16 = arith.truncf %14 : vector<8x64xf32> to vector<8x64xbf16>
    %c0_5 = arith.constant 0 : index
    %c0_6 = arith.constant 0 : index
    %17 = vector.load %arg2[%c0_5, %c0_6] : memref<64x768xbf16, #tpu.memory_space<vmem>>, vector<64x768xbf16>
    %cst_7 = arith.constant dense<0.000000e+00> : vector<8x768xf32>
    %18 = tpu.matmul %16, %17, %cst_7 {dimension_numbers = #tpu.dot_dimension_numbers<[1], [0], [0], [1], [0, 0, 1, 1], [], []>} : vector<8x64xbf16>, vector<64x768xbf16>, vector<8x768xf32> -> vector<8x768xf32>
    %19 = vector.extract_strided_slice %15 {offsets = [0, 0], sizes = [8, 768], strides = [1, 1]} : vector<8x1792xf32> to vector<8x768xf32>
    %20 = arith.addf %18, %19 : vector<8x768xf32>
    %cst_8 = arith.constant 0.000000e+00 : f32
    %21 = vector.broadcast %cst_8 : f32 to vector<8x768xf32>
    %22 = arith.maximumf %20, %21 : vector<8x768xf32>
    %23 = arith.truncf %22 : vector<8x768xf32> to vector<8x768xbf16>
    %c0_9 = arith.constant 0 : index
    %c0_10 = arith.constant 0 : index
    %24 = vector.load %arg3[%c0_9, %c0_10] : memref<768x512xbf16, #tpu.memory_space<vmem>>, vector<768x512xbf16>
    %cst_11 = arith.constant dense<0.000000e+00> : vector<8x512xf32>
    %25 = tpu.matmul %23, %24, %cst_11 {dimension_numbers = #tpu.dot_dimension_numbers<[1], [0], [0], [1], [0, 0, 1, 1], [], []>} : vector<8x768xbf16>, vector<768x512xbf16>, vector<8x512xf32> -> vector<8x512xf32>
    %26 = vector.extract_strided_slice %15 {offsets = [0, 768], sizes = [8, 512], strides = [1, 1]} : vector<8x1792xf32> to vector<8x512xf32>
    %27 = arith.addf %25, %26 : vector<8x512xf32>
    %cst_12 = arith.constant 0.000000e+00 : f32
    %28 = vector.broadcast %cst_12 : f32 to vector<8x512xf32>
    %29 = arith.maximumf %27, %28 : vector<8x512xf32>
    %30 = arith.truncf %29 : vector<8x512xf32> to vector<8x512xbf16>
    %c0_13 = arith.constant 0 : index
    %c0_14 = arith.constant 0 : index
    %31 = vector.load %arg4[%c0_13, %c0_14] : memref<512x256xbf16, #tpu.memory_space<vmem>>, vector<512x256xbf16>
    %cst_15 = arith.constant dense<0.000000e+00> : vector<8x256xf32>
    %32 = tpu.matmul %30, %31, %cst_15 {dimension_numbers = #tpu.dot_dimension_numbers<[1], [0], [0], [1], [0, 0, 1, 1], [], []>} : vector<8x512xbf16>, vector<512x256xbf16>, vector<8x256xf32> -> vector<8x256xf32>
    %33 = vector.extract_strided_slice %15 {offsets = [0, 1280], sizes = [8, 256], strides = [1, 1]} : vector<8x1792xf32> to vector<8x256xf32>
    %34 = arith.addf %32, %33 : vector<8x256xf32>
    %cst_16 = arith.constant 0.000000e+00 : f32
    %35 = vector.broadcast %cst_16 : f32 to vector<8x256xf32>
    %36 = arith.maximumf %34, %35 : vector<8x256xf32>
    %37 = arith.truncf %36 : vector<8x256xf32> to vector<8x256xbf16>
    %c0_17 = arith.constant 0 : index
    %c0_18 = arith.constant 0 : index
    %38 = vector.load %arg5[%c0_17, %c0_18] : memref<256x128xbf16, #tpu.memory_space<vmem>>, vector<256x128xbf16>
    %cst_19 = arith.constant dense<0.000000e+00> : vector<8x128xf32>
    %39 = tpu.matmul %37, %38, %cst_19 {dimension_numbers = #tpu.dot_dimension_numbers<[1], [0], [0], [1], [0, 0, 1, 1], [], []>} : vector<8x256xbf16>, vector<256x128xbf16>, vector<8x128xf32> -> vector<8x128xf32>
    %40 = vector.extract_strided_slice %15 {offsets = [0, 1536], sizes = [8, 128], strides = [1, 1]} : vector<8x1792xf32> to vector<8x128xf32>
    %41 = arith.addf %39, %40 : vector<8x128xf32>
    %cst_20 = arith.constant 0.000000e+00 : f32
    %42 = vector.broadcast %cst_20 : f32 to vector<8x128xf32>
    %43 = arith.maximumf %41, %42 : vector<8x128xf32>
    %c0_21 = arith.constant 0 : index
    %c0_22 = arith.constant 0 : index
    %44 = vector.load %arg7[%c0_21, %c0_22] : memref<8x128xf32, #tpu.memory_space<vmem>>, vector<8x128xf32>
    %45 = vector.extract_strided_slice %15 {offsets = [0, 1664], sizes = [8, 128], strides = [1, 1]} : vector<8x1792xf32> to vector<8x128xf32>
    %46 = vector.extract_strided_slice %44 {offsets = [0, 0], sizes = [1, 128], strides = [1, 1]} : vector<8x128xf32> to vector<1x128xf32>
    %47 = vector.broadcast %46 : vector<1x128xf32> to vector<8x128xf32>
    %48 = arith.mulf %43, %47 : vector<8x128xf32>
    %cst_23 = arith.constant dense<0.000000e+00> : vector<8xf32>
    %49 = vector.multi_reduction <add>, %48, %cst_23 [1] : vector<8x128xf32> to vector<8xf32>
    %50 = vector.shape_cast %49 : vector<8xf32> to vector<8x1xf32>
    %51 = vector.extract_strided_slice %45 {offsets = [0, 0], sizes = [8, 1], strides = [1, 1]} : vector<8x128xf32> to vector<8x1xf32>
    %52 = arith.addf %50, %51 : vector<8x1xf32>
    %53 = vector.extract_strided_slice %44 {offsets = [1, 0], sizes = [1, 128], strides = [1, 1]} : vector<8x128xf32> to vector<1x128xf32>
    %54 = vector.broadcast %53 : vector<1x128xf32> to vector<8x128xf32>
    %55 = arith.mulf %43, %54 : vector<8x128xf32>
    %cst_24 = arith.constant dense<0.000000e+00> : vector<8xf32>
    %56 = vector.multi_reduction <add>, %55, %cst_24 [1] : vector<8x128xf32> to vector<8xf32>
    %57 = vector.shape_cast %56 : vector<8xf32> to vector<8x1xf32>
    %58 = vector.extract_strided_slice %45 {offsets = [0, 1], sizes = [8, 1], strides = [1, 1]} : vector<8x128xf32> to vector<8x1xf32>
    %59 = arith.addf %57, %58 : vector<8x1xf32>
    %60 = arith.negf %59 : vector<8x1xf32>
    %61 = math.exp %60 : vector<8x1xf32>
    %cst_25 = arith.constant 1.000000e+00 : f32
    %62 = vector.broadcast %cst_25 : f32 to vector<8x1xf32>
    %63 = arith.addf %62, %61 : vector<8x1xf32>
    %64 = arith.divf %62, %63 : vector<8x1xf32>
    %65 = arith.negf %52 : vector<8x1xf32>
    %66 = math.exp %65 : vector<8x1xf32>
    %cst_26 = arith.constant 1.000000e+00 : f32
    %67 = vector.broadcast %cst_26 : f32 to vector<8x1xf32>
    %68 = arith.addf %67, %66 : vector<8x1xf32>
    %69 = arith.divf %67, %68 : vector<8x1xf32>
    %70 = arith.mulf %64, %69 : vector<8x1xf32>
    %71 = tpu.iota {dimensions = array<i32: 1>} : vector<1x128xi32>
    %c0_i32 = arith.constant 0 : i32
    %72 = vector.broadcast %c0_i32 : i32 to vector<1x128xi32>
    %73 = arith.cmpi eq, %71, %72 : vector<1x128xi32>
    %cst_27 = arith.constant 0.000000e+00 : f32
    %74 = vector.shape_cast %73 : vector<1x128xi1> to vector<1x128xi1>
    %75 = vector.broadcast %74 : vector<1x128xi1> to vector<8x128xi1>
    %76 = vector.shape_cast %52 : vector<8x1xf32> to vector<8x1xf32>
    %77 = vector.broadcast %76 : vector<8x1xf32> to vector<8x128xf32>
    %78 = vector.broadcast %cst_27 : f32 to vector<8x128xf32>
    %79 = arith.select %75, %77, %78 : vector<8x128xi1>, vector<8x128xf32>
    %c1_i32 = arith.constant 1 : i32
    %80 = vector.broadcast %c1_i32 : i32 to vector<1x128xi32>
    %81 = arith.cmpi eq, %71, %80 : vector<1x128xi32>
    %cst_28 = arith.constant 0.000000e+00 : f32
    %82 = vector.shape_cast %81 : vector<1x128xi1> to vector<1x128xi1>
    %83 = vector.broadcast %82 : vector<1x128xi1> to vector<8x128xi1>
    %84 = vector.shape_cast %59 : vector<8x1xf32> to vector<8x1xf32>
    %85 = vector.broadcast %84 : vector<8x1xf32> to vector<8x128xf32>
    %86 = vector.broadcast %cst_28 : f32 to vector<8x128xf32>
    %87 = arith.select %83, %85, %86 : vector<8x128xi1>, vector<8x128xf32>
    %88 = arith.addf %79, %87 : vector<8x128xf32>
    %c2_i32 = arith.constant 2 : i32
    %89 = vector.broadcast %c2_i32 : i32 to vector<1x128xi32>
    %90 = arith.cmpi eq, %71, %89 : vector<1x128xi32>
    %cst_29 = arith.constant 0.000000e+00 : f32
    %91 = vector.shape_cast %90 : vector<1x128xi1> to vector<1x128xi1>
    %92 = vector.broadcast %91 : vector<1x128xi1> to vector<8x128xi1>
    %93 = vector.shape_cast %70 : vector<8x1xf32> to vector<8x1xf32>
    %94 = vector.broadcast %93 : vector<8x1xf32> to vector<8x128xf32>
    %95 = vector.broadcast %cst_29 : f32 to vector<8x128xf32>
    %96 = arith.select %92, %94, %95 : vector<8x128xi1>, vector<8x128xf32>
    %97 = arith.addf %88, %96 : vector<8x128xf32>
    %c0_30 = arith.constant 0 : index
    %c0_31 = arith.constant 0 : index
    %98 = vector.load %arg8[%c0_30, %c0_31] : memref<8x128xf32, #tpu.memory_space<vmem>>, vector<8x128xf32>
    tpu.vector_store %arg8[%c0_30, %c0_31], %97 {strides = array<i32>} : memref<8x128xf32, #tpu.memory_space<vmem>>, vector<8x128xf32>,
    return
  }
}

</mosaic_0001>

<llo_original>
// kernel: _esmm_forward.1
$region0: #{_esmm_forward.1}
  #allocation0 [shape = 'u32[]', space=smem, size = 0x4, offset = 0x4, fixed_abs, tag = 'smem constant byte address 0x4 - core index']
  #allocation1 [shape = 'u32[144,128]{1,0:T(1,128)}', space=vmem, size = 0x12000, scoped, tag = 'internal scratch']
  %s0 = inlined_call_operand.vmem [shape: s32[8,2], index: 0, kind: input, shape index: {}]
  %s1 = inlined_call_operand.hbm [shape: f32[32,64], index: 1, kind: input, shape index: {}]
  %s2 = inlined_call_operand.hbm [shape: bf16[64,768], index: 2, kind: input, shape index: {}]
  %s3 = inlined_call_operand.hbm [shape: bf16[768,512], index: 3, kind: input, shape index: {}]
  %s4 = inlined_call_operand.hbm [shape: bf16[512,256], index: 4, kind: input, shape index: {}]
  %s5 = inlined_call_operand.hbm [shape: bf16[256,128], index: 5, kind: input, shape index: {}]
  %s6 = inlined_call_operand.hbm [shape: f32[8,1792], index: 6, kind: input, shape index: {}]
  %s7 = inlined_call_operand.vmem [shape: f32[8,128], index: 7, kind: input, shape index: {}]
  %s8 = inlined_call_operand.vmem [shape: f32[8,128], index: 8, kind: output, shape index: {}]
  %s9 = sld [smem:[#allocation0]]
  $region66: #{_esmm_forward.1} parent=0
    _
  %s11 = ssub.s32 1, %s9
  %s12 = scalar_select 0, %s11, %s9
  $region1: #{_esmm_forward.1} parent=0
    #allocation2 [shape = 'u8[16384]{0}', space=vmem, size = 0x4000, scoped, tag = 'input window, operand 1, single buffered']
    #allocation3 [shape = 's32[1]{0}', space=sflag, size = 0x4, scoped, tag = 'scoped memory for _esmm_forward.1']
    #allocation4 [shape = 'u8[98304]{0}', space=vmem, size = 0x18000, scoped, tag = 'input window, operand 2, single buffered']
    #allocation5 [shape = 's32[1]{0}', space=sflag, size = 0x4, scoped, tag = 'scoped memory for _esmm_forward.1']
    #allocation6 [shape = 'u8[786432]{0}', space=vmem, size = 0xc0000, scoped, tag = 'input window, operand 3, single buffered']
    #allocation7 [shape = 'u8[262144]{0}', space=vmem, size = 0x40000, scoped, tag = 'input window, operand 4, single buffered']
    #allocation8 [shape = 's32[1]{0}', space=sflag, size = 0x4, scoped, tag = 'scoped memory for _esmm_forward.1']
    #allocation9 [shape = 'u8[65536]{0}', space=vmem, size = 0x10000, scoped, tag = 'input window, operand 5, single buffered']
    #allocation10 [shape = 'u8[57344]{0}', space=vmem, size = 0xe000, scoped, tag = 'input window, operand 6, single buffered']
    #allocation11 [shape = 's32[1]{0}', space=sflag, size = 0x4, scoped, tag = 'scoped memory for _esmm_forward.1']
    %13 = vsyncpa [#allocation3], 0
    %14 = vsyncpa [#allocation5], 0
    %15 = vsyncpa [#allocation8], 0
    %16 = vsyncpa [#allocation11], 0
    // Predicated region
    $region2: #{_esmm_forward.1} parent=1 // pred_check
      _
    $region3: #{_esmm_forward.1} parent=1 // pred_check_branch
      %18 = sbr.rel (0) target = $region5
    $region4: #{_esmm_forward.1} parent=1 // pred_region
      _
    $region5: #{_esmm_forward.1} parent=1 // pred_fallthru
      _
    // Predicated region
    $region6: #{_esmm_forward.1} parent=1 // pred_check
      _
    $region7: #{_esmm_forward.1} parent=1 // pred_check_branch
      %20 = sbr.rel (0) target = $region9
    $region8: #{_esmm_forward.1} parent=1 // pred_region
      %s22 = ssub.s32 512, 512
      %23 = vsyncadd [#allocation3], %s22
      %s24 = sshll.u32 [#allocation2], 4
      %s25 = int_to_ptr.vmem [resolvable:$true] %s24
      %30 = dma.hbm_to_vmem [thread:$0]  %s1, 512, %s25, [#allocation3], 128, 128, 8
    $region9: #{_esmm_forward.1} parent=1 // pred_fallthru
      _
    // Predicated region
    $region10: #{_esmm_forward.1} parent=1 // pred_check
      _
    $region11: #{_esmm_forward.1} parent=1 // pred_check_branch
      %32 = sbr.rel (0) target = $region13
    $region12: #{_esmm_forward.1} parent=1 // pred_region
      %s34 = ssub.s32 3072, 3072
      %35 = vsyncadd [#allocation5], %s34
      %s36 = sshll.u32 [#allocation4], 4
      %s37 = int_to_ptr.vmem [resolvable:$true] %s36
      %42 = dma.hbm_to_vmem [thread:$0]  %s2, 3072, %s37, [#allocation5], 384, 384, 24
    $region13: #{_esmm_forward.1} parent=1 // pred_fallthru
      _
    // Predicated region
    $region14: #{_esmm_forward.1} parent=1 // pred_check
      _
    $region15: #{_esmm_forward.1} parent=1 // pred_check_branch
      %44 = sbr.rel (0) target = $region17
    $region16: #{_esmm_forward.1} parent=1 // pred_region
      %s46 = ssub.s32 24576, 24576
      %47 = vsyncadd [#allocation5], %s46
      %s48 = sshll.u32 [#allocation6], 4
      %s49 = int_to_ptr.vmem [resolvable:$true] %s48
      %54 = dma.hbm_to_vmem [thread:$0]  %s3, 24576, %s49, [#allocation5], 256, 256, 16
    $region17: #{_esmm_forward.1} parent=1 // pred_fallthru
      _
    // Predicated region
    $region18: #{_esmm_forward.1} parent=1 // pred_check
      _
    $region19: #{_esmm_forward.1} parent=1 // pred_check_branch
      %56 = sbr.rel (0) target = $region21
    $region20: #{_esmm_forward.1} parent=1 // pred_region
      %s58 = ssub.s32 8192, 8192
      %59 = vsyncadd [#allocation8], %s58
      %s60 = sshll.u32 [#allocation7], 4
      %s61 = int_to_ptr.vmem [resolvable:$true] %s60
      %66 = dma.hbm_to_vmem [thread:$0]  %s4, 8192, %s61, [#allocation8], 128, 128, 8
    $region21: #{_esmm_forward.1} parent=1 // pred_fallthru
      _
    // Predicated region
    $region22: #{_esmm_forward.1} parent=1 // pred_check
      _
    $region23: #{_esmm_forward.1} parent=1 // pred_check_branch
      %68 = sbr.rel (0) target = $region25
    $region24: #{_esmm_forward.1} parent=1 // pred_region
      %s70 = ssub.s32 2048, 2048
      %71 = vsyncadd [#allocation8], %s70
      %s72 = sshll.u32 [#allocation9], 4
      %s73 = int_to_ptr.vmem [resolvable:$true] %s72
      %78 = dma.hbm_to_vmem [thread:$0]  %s5, 2048, %s73, [#allocation8], 64, 64, 4
    $region25: #{_esmm_forward.1} parent=1 // pred_fallthru
      _
    // Predicated region
    $region26: #{_esmm_forward.1} parent=1 // pred_check
      _
    $region27: #{_esmm_forward.1} parent=1 // pred_check_branch
      %80 = sbr.rel (0) target = $region29
    $region28: #{_esmm_forward.1} parent=1 // pred_region
      %s82 = ssub.s32 1792, 1792
      %83 = vsyncadd [#allocation11], %s82
      %s85 = sshll.u32 [#allocation10], 4
      %s86 = int_to_ptr.vmem [resolvable:$true] %s85
      %88 = dma.hbm_to_vmem [thread:$0]  %s6, 1792, %s86, [#allocation11]
    $region29: #{_esmm_forward.1} parent=1 // pred_fallthru
      _
    // Predicated region
    $region30: #{_esmm_forward.1} parent=1 // pred_check
      _
    $region31: #{_esmm_forward.1} parent=1 // pred_check_branch
      %90 = sbr.rel (0) target = $region33
    $region32: #{_esmm_forward.1} parent=1 // pred_region
      _
    $region33: #{_esmm_forward.1} parent=1 // pred_fallthru
      _
    // Predicated region
    $region34: #{_esmm_forward.1} parent=1 // pred_check
      _
    $region35: #{_esmm_forward.1} parent=1 // pred_check_branch
      %92 = sbr.rel (0) target = $region37
    $region36: #{_esmm_forward.1} parent=1 // pred_region
      %93 = dma.done [#allocation3], 512
    $region37: #{_esmm_forward.1} parent=1 // pred_fallthru
      _
    // Predicated region
    $region38: #{_esmm_forward.1} parent=1 // pred_check
      _
    $region39: #{_esmm_forward.1} parent=1 // pred_check_branch
      %95 = sbr.rel (0) target = $region41
    $region40: #{_esmm_forward.1} parent=1 // pred_region
      %96 = dma.done [#allocation5], 3072
    $region41: #{_esmm_forward.1} parent=1 // pred_fallthru
      _
    // Predicated region
    $region42: #{_esmm_forward.1} parent=1 // pred_check
      _
    $region43: #{_esmm_forward.1} parent=1 // pred_check_branch
      %98 = sbr.rel (0) target = $region45
    $region44: #{_esmm_forward.1} parent=1 // pred_region
      %99 = dma.done [#allocation5], 24576
    $region45: #{_esmm_forward.1} parent=1 // pred_fallthru
      _
    // Predicated region
    $region46: #{_esmm_forward.1} parent=1 // pred_check
      _
    $region47: #{_esmm_forward.1} parent=1 // pred_check_branch
      %101 = sbr.rel (0) target = $region49
    $region48: #{_esmm_forward.1} parent=1 // pred_region
      %102 = dma.done [#allocation8], 8192
    $region49: #{_esmm_forward.1} parent=1 // pred_fallthru
      _
    // Predicated region
    $region50: #{_esmm_forward.1} parent=1 // pred_check
      _
    $region51: #{_esmm_forward.1} parent=1 // pred_check_branch
      %104 = sbr.rel (0) target = $region53
    $region52: #{_esmm_forward.1} parent=1 // pred_region
      %105 = dma.done [#allocation8], 2048
    $region53: #{_esmm_forward.1} parent=1 // pred_fallthru
      _
    // Predicated region
    $region54: #{_esmm_forward.1} parent=1 // pred_check
      _
    $region55: #{_esmm_forward.1} parent=1 // pred_check_branch
      %107 = sbr.rel (0) target = $region57
    $region56: #{_esmm_forward.1} parent=1 // pred_region
      %108 = dma.done [#allocation11], 1792
    $region57: #{_esmm_forward.1} parent=1 // pred_fallthru
      _
    %v110 = vld [vmem:[%s0] sm:$0xff]
    %v111 = vlaneseq
    %v112 = vand.u32 %v111, 127
    %113 = vset.pattern.permute.xlu0 0
    %114 = vperm.xlu0 %113, %v110
    %v115 = vpop.permute.xlu0 %114
    %vm116 = vcmp.eq.s32.totalorder %v112, %v115
    %v117 = vadd.s32 %v110, 16
    %118 = vset.pattern.permute.xlu0 1
    %119 = vperm.xlu0 %118, %v117
    %v120 = vpop.permute.xlu0 %119
    %vm121 = vcmp.eq.s32.totalorder %v112, %v120
    %vm122 = vmor %vm116, %vm121
    %v123 = vsel %vm122, 1, 0
    %v124 = vcvt.s32.f32 %v123
    %v125 = vld [vmem:[#allocation2] sm:$0xff]
    %v126 = vld [vmem:[#allocation2 + $0x8] sm:$0xff]
    %v127 = vld [vmem:[#allocation2 + $0x10] sm:$0xff]
    %v128 = vld [vmem:[#allocation2 + $0x18] sm:$0xff]
    %vm129 = vcmask 261120
    %v131 = vsel %vm129, %v124, 0
    %133 = vmatprep.subr.mxu0 0.0
    %134 = vmatpush1.msra.mxu0 %v125
    %135 = vmatprep.subr.mxu0 0.0
    %136 = vmatpush1.msra.mxu0 %v126
    %137 = vmatprep.subr.mxu0 0.0
    %138 = vmatpush1.msra.mxu0 %v127
    %139 = vmatprep.subr.mxu0 0.0
    %140 = vmatpush1.msra.mxu0 %v128
    %141 = vmatprep.subr.mxu0 0.0
    %142 = vmatpush1.msra.mxu0 0.0
    %143 = vmatprep.subr.mxu0 0.0
    %144 = vmatpush1.msra.mxu0 0.0
    %145 = vmatprep.subr.mxu0 0.0
    %146 = vmatpush1.msra.mxu0 0.0
    %147 = vmatprep.subr.mxu0 0.0
    %148 = vmatpush1.msra.mxu0 0.0
    %149 = vmatprep.subr.mxu0 0.0
    %150 = vmatpush1.msra.mxu0 0.0
    %151 = vmatprep.subr.mxu0 0.0
    %152 = vmatpush1.msra.mxu0 0.0
    %153 = vmatprep.subr.mxu0 0.0
    %154 = vmatpush1.msra.mxu0 0.0
    %155 = vmatprep.subr.mxu0 0.0
    %156 = vmatpush1.msra.mxu0 0.0
    %157 = vmatprep.subr.mxu0 0.0
    %158 = vmatpush1.msra.mxu0 0.0
    %159 = vmatprep.subr.mxu0 0.0
    %160 = vmatpush1.msra.mxu0 0.0
    %161 = vmatprep.subr.mxu0 0.0
    %162 = vmatpush1.msra.mxu0 0.0
    %163 = vmatprep.subr.mxu0 0.0
    %164 = vmatpush1.msra.mxu0 0.0
    %165 = vmatprep.subr.mxu0 0.0
    %166 = vmatpush1.msra.mxu0 0.0
    %167 = vmatprep.subr.mxu0 0.0
    %168 = vmatpush1.msra.mxu0 0.0
    %169 = vmatprep.subr.mxu0 0.0
    %170 = vmatpush1.msra.mxu0 0.0
    %171 = vmatprep.subr.mxu0 0.0
    %172 = vmatpush1.msra.mxu0 0.0
    %173 = vmatprep.subr.mxu0 0.0
    %174 = vmatpush1.msra.mxu0 0.0
    %175 = vmatprep.subr.mxu0 0.0
    %176 = vmatpush1.msra.mxu0 0.0
    %177 = vmatprep.subr.mxu0 0.0
    %178 = vmatpush1.msra.mxu0 0.0
    %179 = vmatprep.subr.mxu0 0.0
    %180 = vmatpush1.msra.mxu0 0.0
    %181 = vmatprep.subr.mxu0 0.0
    %182 = vmatpush1.msra.mxu0 0.0
    %183 = vmatprep.subr.mxu0 0.0
    %184 = vmatpush1.msra.mxu0 0.0
    %185 = vmatprep.subr.mxu0 0.0
    %186 = vmatpush1.msra.mxu0 0.0
    %187 = vmatprep.subr.mxu0 0.0
    %188 = vmatpush1.msra.mxu0 0.0
    %189 = vmatprep.subr.mxu0 0.0
    %190 = vmatpush1.msra.mxu0 0.0
    %191 = vmatprep.subr.mxu0 0.0
    %192 = vmatpush1.msra.mxu0 0.0
    %193 = vmatprep.subr.mxu0 0.0
    %194 = vmatpush1.msra.mxu0 0.0
    %195 = vmatprep.subr.mxu0 0.0
    %196 = vmatpush1.msra.mxu0 0.0
    %197 = vmatprep.mubr.f32.mxu0 0.0
    %198 = vmatmul.mubr.f32.gmra.mrb[0].mxu0 %v131
    %v199 = vpop.f32.mrb[0].mxu0
    %v200 = vadd.f32 0.0, %v199
    %v201 = vpop.f32.mrb[0].mxu0
    %202 = vdwg.mxu0
    %v203 = vld [vmem:[#allocation10] sm:$0xff]
    %v204 = vld [vmem:[#allocation10 + $0x8] sm:$0xff]
    %v205 = vld [vmem:[#allocation10 + $0x10] sm:$0xff]
    %v206 = vld [vmem:[#allocation10 + $0x18] sm:$0xff]
    %v207 = vld [vmem:[#allocation10 + $0x20] sm:$0xff]
    %v208 = vld [vmem:[#allocation10 + $0x28] sm:$0xff]
    %v209 = vld [vmem:[#allocation10 + $0x30] sm:$0xff]
    %v210 = vld [vmem:[#allocation10 + $0x38] sm:$0xff]
    %v211 = vld [vmem:[#allocation10 + $0x40] sm:$0xff]
    %v212 = vld [vmem:[#allocation10 + $0x48] sm:$0xff]
    %v213 = vld [vmem:[#allocation10 + $0x50] sm:$0xff]
    %v214 = vld [vmem:[#allocation10 + $0x58] sm:$0xff]
    %v215 = vld [vmem:[#allocation10 + $0x60] sm:$0xff]
    %v216 = vld [vmem:[#allocation10 + $0x68] sm:$0xff]
    %v217 = vpack.c.bf16 %v200, %v200
    %v218 = vld [vmem:[#allocation4] sm:$0xff]
    %v219 = vld [vmem:[#allocation4 + $0x8] sm:$0xff]
    %v220 = vld [vmem:[#allocation4 + $0x10] sm:$0xff]
    %v221 = vld [vmem:[#allocation4 + $0x18] sm:$0xff]
    %v222 = vld [vmem:[#allocation4 + $0x20] sm:$0xff]
    %v223 = vld [vmem:[#allocation4 + $0x28] sm:$0xff]
    %v224 = vld [vmem:[#allocation4 + $0x30] sm:$0xff]
    %v225 = vld [vmem:[#allocation4 + $0x38] sm:$0xff]
    %v226 = vld [vmem:[#allocation4 + $0x40] sm:$0xff]
    %v227 = vld [vmem:[#allocation4 + $0x48] sm:$0xff]
    %v228 = vld [vmem:[#allocation4 + $0x50] sm:$0xff]
    %v229 = vld [vmem:[#allocation4 + $0x58] sm:$0xff]
    %v230 = vld [vmem:[#allocation4 + $0x60] sm:$0xff]
    %v231 = vld [vmem:[#allocation4 + $0x68] sm:$0xff]
    %v232 = vld [vmem:[#allocation4 + $0x70] sm:$0xff]
    %v233 = vld [vmem:[#allocation4 + $0x78] sm:$0xff]
    %v234 = vld [vmem:[#allocation4 + $0x80] sm:$0xff]
    %v235 = vld [vmem:[#allocation4 + $0x88] sm:$0xff]
    %v236 = vld [vmem:[#allocation4 + $0x90] sm:$0xff]
    %v237 = vld [vmem:[#allocation4 + $0x98] sm:$0xff]
    %v238 = vld [vmem:[#allocation4 + $0xa0] sm:$0xff]
    %v239 = vld [vmem:[#allocation4 + $0xa8] sm:$0xff]
    %v240 = vld [vmem:[#allocation4 + $0xb0] sm:$0xff]
    %v241 = vld [vmem:[#allocation4 + $0xb8] sm:$0xff]
    %v266 = vunpack.c.l.b16 %v218
    %v267 = vunpack.c.h.b16 %v218
    %v268 = vunpack.c.l.b16 %v219
    %v269 = vunpack.c.h.b16 %v219
    %v270 = vunpack.c.l.b16 %v220
    %v271 = vunpack.c.h.b16 %v220
    %v272 = vunpack.c.l.b16 %v221
    %v273 = vunpack.c.h.b16 %v221
    %v274 = vunpack.c.l.b16 %v222
    %v275 = vunpack.c.h.b16 %v222
    %v276 = vunpack.c.l.b16 %v223
    %v277 = vunpack.c.h.b16 %v223
    %v278 = vunpack.c.l.b16 %v224
    %v279 = vunpack.c.h.b16 %v224
    %v280 = vunpack.c.l.b16 %v225
    %v281 = vunpack.c.h.b16 %v225
    %v282 = vunpack.c.l.b16 %v226
    %v283 = vunpack.c.h.b16 %v226
    %v284 = vunpack.c.l.b16 %v227
    %v285 = vunpack.c.h.b16 %v227
    %v286 = vunpack.c.l.b16 %v228
    %v287 = vunpack.c.h.b16 %v228
    %v288 = vunpack.c.l.b16 %v229
    %v289 = vunpack.c.h.b16 %v229
    %v290 = vunpack.c.l.b16 %v230
    %v291 = vunpack.c.h.b16 %v230
    %v292 = vunpack.c.l.b16 %v231
    %v293 = vunpack.c.h.b16 %v231
    %v294 = vunpack.c.l.b16 %v232
    %v295 = vunpack.c.h.b16 %v232
    %v296 = vunpack.c.l.b16 %v233
    %v297 = vunpack.c.h.b16 %v233
    %v298 = vunpack.c.l.b16 %v234
    %v299 = vunpack.c.h.b16 %v234
    %v300 = vunpack.c.l.b16 %v235
    %v301 = vunpack.c.h.b16 %v235
    %v302 = vunpack.c.l.b16 %v236
    %v303 = vunpack.c.h.b16 %v236
    %v304 = vunpack.c.l.b16 %v237
    %v305 = vunpack.c.h.b16 %v237
    %v306 = vunpack.c.l.b16 %v238
    %v307 = vunpack.c.h.b16 %v238
    %v308 = vunpack.c.l.b16 %v239
    %v309 = vunpack.c.h.b16 %v239
    %v310 = vunpack.c.l.b16 %v240
    %v311 = vunpack.c.h.b16 %v240
    %v312 = vunpack.c.l.b16 %v241
    %v313 = vunpack.c.h.b16 %v241
    %v314 = vpack.c.b16 %v272, %v266
    %v315 = vpack.c.b16 %v273, %v267
    %v316 = vpack.c.b16 %v274, %v268
    %v317 = vpack.c.b16 %v275, %v269
    %v318 = vpack.c.b16 %v276, %v270
    %v319 = vpack.c.b16 %v277, %v271
    %v320 = vpack.c.b16 %v284, %v278
    %v321 = vpack.c.b16 %v285, %v279
    %v322 = vpack.c.b16 %v286, %v280
    %v323 = vpack.c.b16 %v287, %v281
    %v324 = vpack.c.b16 %v288, %v282
    %v325 = vpack.c.b16 %v289, %v283
    %v326 = vpack.c.b16 %v296, %v290
    %v327 = vpack.c.b16 %v297, %v291
    %v328 = vpack.c.b16 %v298, %v292
    %v329 = vpack.c.b16 %v299, %v293
    %v330 = vpack.c.b16 %v300, %v294
    %v331 = vpack.c.b16 %v301, %v295
    %v332 = vpack.c.b16 %v308, %v302
    %v333 = vpack.c.b16 %v309, %v303
    %v334 = vpack.c.b16 %v310, %v304
    %v335 = vpack.c.b16 %v311, %v305
    %v336 = vpack.c.b16 %v312, %v306
    %v337 = vpack.c.b16 %v313, %v307
    %vm362 = vcmask 523264
    %v364 = vsel %vm362, %v217, 0
    %366 = vmatprep.subr.bf16.mxu0 %v315
    %367 = vmatpush1.bf16.msra.mxu0 %v314
    %368 = vmatprep.subr.bf16.mxu0 %v321
    %369 = vmatpush1.bf16.msra.mxu0 %v320
    %370 = vmatprep.subr.bf16.mxu0 %v327
    %371 = vmatpush1.bf16.msra.mxu0 %v326
    %372 = vmatprep.subr.bf16.mxu0 %v333
    %373 = vmatpush1.bf16.msra.mxu0 %v332
    %374 = vmatprep.subr.bf16.mxu0 0
    %375 = vmatpush1.bf16.msra.mxu0 0
    %376 = vmatprep.subr.bf16.mxu0 0
    %377 = vmatpush1.bf16.msra.mxu0 0
    %378 = vmatprep.subr.bf16.mxu0 0
    %379 = vmatpush1.bf16.msra.mxu0 0
    %380 = vmatprep.subr.bf16.mxu0 0
    %381 = vmatpush1.bf16.msra.mxu0 0
    %382 = vmatprep.subr.bf16.mxu0 0
    %383 = vmatpush1.bf16.msra.mxu0 0
    %384 = vmatprep.subr.bf16.mxu0 0
    %385 = vmatpush1.bf16.msra.mxu0 0
    %386 = vmatprep.subr.bf16.mxu0 0
    %387 = vmatpush1.bf16.msra.mxu0 0
    %388 = vmatprep.subr.bf16.mxu0 0
    %389 = vmatpush1.bf16.msra.mxu0 0
    %390 = vmatprep.subr.bf16.mxu0 0
    %391 = vmatpush1.bf16.msra.mxu0 0
    %392 = vmatprep.subr.bf16.mxu0 0
    %393 = vmatpush1.bf16.msra.mxu0 0
    %394 = vmatprep.subr.bf16.mxu0 0
    %395 = vmatpush1.bf16.msra.mxu0 0
    %396 = vmatprep.subr.bf16.mxu0 0
    %397 = vmatpush1.bf16.msra.mxu0 0
    %398 = vmatprep.mubr.bf16.mxu0 0
    %399 = vmatmul.mubr.bf16.gmra.mrb[0].mxu0 %v364
    %v400 = vpop.f32.mrb[0].mxu0
    %v401 = vadd.f32 %v203, %v400
    %v402 = vpop.f32.mrb[0].mxu0
    %v403 = vadd.f32 %v204, %v402
    %v404 = vpop.f32.mrb[0].mxu0
    %v405 = vpop.f32.mrb[0].mxu0
    %406 = vdwg.mxu0
    %407 = vmatprep.subr.bf16.mxu0 %v317
    %408 = vmatpush1.bf16.msra.mxu0 %v316
    %409 = vmatprep.subr.bf16.mxu0 %v323
    %410 = vmatpush1.bf16.msra.mxu0 %v322
    %411 = vmatprep.subr.bf16.mxu0 %v329
    %412 = vmatpush1.bf16.msra.mxu0 %v328
    %413 = vmatprep.subr.bf16.mxu0 %v335
    %414 = vmatpush1.bf16.msra.mxu0 %v334
    %415 = vmatprep.subr.bf16.mxu0 0
    %416 = vmatpush1.bf16.msra.mxu0 0
    %417 = vmatprep.subr.bf16.mxu0 0
    %418 = vmatpush1.bf16.msra.mxu0 0
    %419 = vmatprep.subr.bf16.mxu0 0
    %420 = vmatpush1.bf16.msra.mxu0 0
    %421 = vmatprep.subr.bf16.mxu0 0
    %422 = vmatpush1.bf16.msra.mxu0 0
    %423 = vmatprep.subr.bf16.mxu0 0
    %424 = vmatpush1.bf16.msra.mxu0 0
    %425 = vmatprep.subr.bf16.mxu0 0
    %426 = vmatpush1.bf16.msra.mxu0 0
    %427 = vmatprep.subr.bf16.mxu0 0
    %428 = vmatpush1.bf16.msra.mxu0 0
    %429 = vmatprep.subr.bf16.mxu0 0
    %430 = vmatpush1.bf16.msra.mxu0 0
    %431 = vmatprep.subr.bf16.mxu0 0
    %432 = vmatpush1.bf16.msra.mxu0 0
    %433 = vmatprep.subr.bf16.mxu0 0
    %434 = vmatpush1.bf16.msra.mxu0 0
    %435 = vmatprep.subr.bf16.mxu0 0
    %436 = vmatpush1.bf16.msra.mxu0 0
    %437 = vmatprep.subr.bf16.mxu0 0
    %438 = vmatpush1.bf16.msra.mxu0 0
    %439 = vmatprep.mubr.bf16.mxu0 0
    %440 = vmatmul.mubr.bf16.gmra.mrb[0].mxu0 %v364
    %v441 = vpop.f32.mrb[0].mxu0
    %v442 = vadd.f32 %v205, %v441
    %v443 = vpop.f32.mrb[0].mxu0
    %v444 = vadd.f32 %v206, %v443
    %v445 = vpop.f32.mrb[0].mxu0
    %v446 = vpop.f32.mrb[0].mxu0
    %447 = vdwg.mxu0
    %448 = vmatprep.subr.bf16.mxu0 %v319
    %449 = vmatpush1.bf16.msra.mxu0 %v318
    %450 = vmatprep.subr.bf16.mxu0 %v325
    %451 = vmatpush1.bf16.msra.mxu0 %v324
    %452 = vmatprep.subr.bf16.mxu0 %v331
    %453 = vmatpush1.bf16.msra.mxu0 %v330
    %454 = vmatprep.subr.bf16.mxu0 %v337
    %455 = vmatpush1.bf16.msra.mxu0 %v336
    %456 = vmatprep.subr.bf16.mxu0 0
    %457 = vmatpush1.bf16.msra.mxu0 0
    %458 = vmatprep.subr.bf16.mxu0 0
    %459 = vmatpush1.bf16.msra.mxu0 0
    %460 = vmatprep.subr.bf16.mxu0 0
    %461 = vmatpush1.bf16.msra.mxu0 0
    %462 = vmatprep.subr.bf16.mxu0 0
    %463 = vmatpush1.bf16.msra.mxu0 0
    %464 = vmatprep.subr.bf16.mxu0 0
    %465 = vmatpush1.bf16.msra.mxu0 0
    %466 = vmatprep.subr.bf16.mxu0 0
    %467 = vmatpush1.bf16.msra.mxu0 0
    %468 = vmatprep.subr.bf16.mxu0 0
    %469 = vmatpush1.bf16.msra.mxu0 0
    %470 = vmatprep.subr.bf16.mxu0 0
    %471 = vmatpush1.bf16.msra.mxu0 0
    %472 = vmatprep.subr.bf16.mxu0 0
    %473 = vmatpush1.bf16.msra.mxu0 0
    %474 = vmatprep.subr.bf16.mxu0 0
    %475 = vmatpush1.bf16.msra.mxu0 0
    %476 = vmatprep.subr.bf16.mxu0 0
    %477 = vmatpush1.bf16.msra.mxu0 0
    %478 = vmatprep.subr.bf16.mxu0 0
    %479 = vmatpush1.bf16.msra.mxu0 0
    %480 = vmatprep.mubr.bf16.mxu0 0
    %481 = vmatmul.mubr.bf16.gmra.mrb[0].mxu0 %v364
    %v482 = vpop.f32.mrb[0].mxu0
    %v483 = vadd.f32 %v207, %v482
    %v484 = vpop.f32.mrb[0].mxu0
    %v485 = vadd.f32 %v208, %v484
    %v486 = vpop.f32.mrb[0].mxu0
    %v487 = vpop.f32.mrb[0].mxu0
    %488 = vdwg.mxu0
    %v489 = vmax.f32 %v401, 0.0
    %v490 = vmax.f32 %v403, 0.0
    %v491 = vmax.f32 %v442, 0.0
    %v492 = vmax.f32 %v444, 0.0
    %v493 = vmax.f32 %v483, 0.0
    %v494 = vmax.f32 %v485, 0.0
    %v495 = vpack.c.bf16 %v489, %v489
    %v496 = vpack.c.bf16 %v490, %v490
    %v497 = vpack.c.bf16 %v491, %v491
    %v498 = vpack.c.bf16 %v492, %v492
    %v499 = vpack.c.bf16 %v493, %v493
    %v500 = vpack.c.bf16 %v494, %v494
    %v501 = vld [vmem:[#allocation6] sm:$0xff]
    %v502 = vld [vmem:[#allocation6 + $0x8] sm:$0xff]
    %v503 = vld [vmem:[#allocation6 + $0x10] sm:$0xff]
    %v504 = vld [vmem:[#allocation6 + $0x18] sm:$0xff]
    %v505 = vld [vmem:[#allocation6 + $0x20] sm:$0xff]
    %v506 = vld [vmem:[#allocation6 + $0x28] sm:$0xff]
    %v507 = vld [vmem:[#allocation6 + $0x30] sm:$0xff]
    %v508 = vld [vmem:[#allocation6 + $0x38] sm:$0xff]
    %v509 = vld [vmem:[#allocation6 + $0x40] sm:$0xff]
    %v510 = vld [vmem:[#allocation6 + $0x48] sm:$0xff]
    %v511 = vld [vmem:[#allocation6 + $0x50] sm:$0xff]
    %v512 = vld [vmem:[#allocation6 + $0x58] sm:$0xff]
    %v513 = vld [vmem:[#allocation6 + $0x60] sm:$0xff]
    %v514 = vld [vmem:[#allocation6 + $0x68] sm:$0xff]
    %v515 = vld [vmem:[#allocation6 + $0x70] sm:$0xff]
    %v516 = vld [vmem:[#allocation6 + $0x78] sm:$0xff]
    %v517 = vld [vmem:[#allocation6 + $0x80] sm:$0xff]
    %v518 = vld [vmem:[#allocation6 + $0x88] sm:$0xff]
    %v519 = vld [vmem:[#allocation6 + $0x90] sm:$0xff]
    %v520 = vld [vmem:[#allocation6 + $0x98] sm:$0xff]
    %v521 = vld [vmem:[#allocation6 + $0xa0] sm:$0xff]
    %v522 = vld [vmem:[#allocation6 + $0xa8] sm:$0xff]
    %v523 = vld [vmem:[#allocation6 + $0xb0] sm:$0xff]
    %v524 = vld [vmem:[#allocation6 + $0xb8] sm:$0xff]
    %v525 = vld [vmem:[#allocation6 + $0xc0] sm:$0xff]
    %v526 = vld [vmem:[#allocation6 + $0xc8] sm:$0xff]
    %v527 = vld [vmem:[#allocation6 + $0xd0] sm:$0xff]
    %v528 = vld [vmem:[#allocation6 + $0xd8] sm:$0xff]
    %v529 = vld [vmem:[#allocation6 + $0xe0] sm:$0xff]
    %v530 = vld [vmem:[#allocation6 + $0xe8] sm:$0xff]
    %v531 = vld [vmem:[#allocation6 + $0xf0] sm:$0xff]
    %v532 = vld [vmem:[#allocation6 + $0xf8] sm:$0xff]
    %v533 = vld [vmem:[#allocation6 + $0x100] sm:$0xff]
    %v534 = vld [vmem:[#allocation6 + $0x108] sm:$0xff]
    %v535 = vld [vmem:[#allocation6 + $0x110] sm:$0xff]
    %v536 = vld [vmem:[#allocation6 + $0x118] sm:$0xff]
    %v537 = vld [vmem:[#allocation6 + $0x120] sm:$0xff]
    %v538 = vld [vmem:[#allocation6 + $0x128] sm:$0xff]
    %v539 = vld [vmem:[#allocation6 + $0x130] sm:$0xff]
    %v540 = vld [vmem:[#allocation6 + $0x138] sm:$0xff]
    %v541 = vld [vmem:[#allocation6 + $0x140] sm:$0xff]
    %v542 = vld [vmem:[#allocation6 + $0x148] sm:$0xff]
    %v543 = vld [vmem:[#allocation6 + $0x150] sm:$0xff]
    %v544 = vld [vmem:[#allocation6 + $0x158] sm:$0xff]
    %v545 = vld [vmem:[#allocation6 + $0x160] sm:$0xff]
    %v546 = vld [vmem:[#allocation6 + $0x168] sm:$0xff]
    %v547 = vld [vmem:[#allocation6 + $0x170] sm:$0xff]
    %v548 = vld [vmem:[#allocation6 + $0x178] sm:$0xff]
    %v549 = vld [vmem:[#allocation6 + $0x180] sm:$0xff]
    %v550 = vld [vmem:[#allocation6 + $0x188] sm:$0xff]
    %v551 = vld [vmem:[#allocation6 + $0x190] sm:$0xff]
    %v552 = vld [vmem:[#allocation6 + $0x198] sm:$0xff]
    %v553 = vld [vmem:[#allocation6 + $0x1a0] sm:$0xff]
    %v554 = vld [vmem:[#allocation6 + $0x1a8] sm:$0xff]
    %v555 = vld [vmem:[#allocation6 + $0x1b0] sm:$0xff]
    %v556 = vld [vmem:[#allocation6 + $0x1b8] sm:$0xff]
    %v557 = vld [vmem:[#allocation6 + $0x1c0] sm:$0xff]
    %v558 = vld [vmem:[#allocation6 + $0x1c8] sm:$0xff]
    %v559 = vld [vmem:[#allocation6 + $0x1d0] sm:$0xff]
    %v560 = vld [vmem:[#allocation6 + $0x1d8] sm:$0xff]
    %v561 = vld [vmem:[#allocation6 + $0x1e0] sm:$0xff]
    %v562 = vld [vmem:[#allocation6 + $0x1e8] sm:$0xff]
    %v563 = vld [vmem:[#allocation6 + $0x1f0] sm:$0xff]
    %v564 = vld [vmem:[#allocation6 + $0x1f8] sm:$0xff]
    %v565 = vld [vmem:[#allocation6 + $0x200] sm:$0xff]
    %v566 = vld [vmem:[#allocation6 + $0x208] sm:$0xff]
    %v567 = vld [vmem:[#allocation6 + $0x210] sm:$0xff]
    %v568 = vld [vmem:[#allocation6 + $0x218] sm:$0xff]
    %v569 = vld [vmem:[#allocation6 + $0x220] sm:$0xff]
    %v570 = vld [vmem:[#allocation6 + $0x228] sm:$0xff]
    %v571 = vld [vmem:[#allocation6 + $0x230] sm:$0xff]
    %v572 = vld [vmem:[#allocation6 + $0x238] sm:$0xff]
    %v573 = vld [vmem:[#allocation6 + $0x240] sm:$0xff]
    %v574 = vld [vmem:[#allocation6 + $0x248] sm:$0xff]
    %v575 = vld [vmem:[#allocation6 + $0x250] sm:$0xff]
    %v576 = vld [vmem:[#allocation6 + $0x258] sm:$0xff]
    %v577 = vld [vmem:[#allocation6 + $0x260] sm:$0xff]
    %v578 = vld [vmem:[#allocation6 + $0x268] sm:$0xff]
    %v579 = vld [vmem:[#allocation6 + $0x270] sm:$0xff]
    %v580 = vld [vmem:[#allocation6 + $0x278] sm:$0xff]
    %v581 = vld [vmem:[#allocation6 + $0x280] sm:$0xff]
    %v582 = vld [vmem:[#allocation6 + $0x288] sm:$0xff]
    %v583 = vld [vmem:[#allocation6 + $0x290] sm:$0xff]
    %v584 = vld [vmem:[#allocation6 + $0x298] sm:$0xff]
    %v585 = vld [vmem:[#allocation6 + $0x2a0] sm:$0xff]
    %v586 = vld [vmem:[#allocation6 + $0x2a8] sm:$0xff]
    %v587 = vld [vmem:[#allocation6 + $0x2b0] sm:$0xff]
    %v588 = vld [vmem:[#allocation6 + $0x2b8] sm:$0xff]
    %v589 = vld [vmem:[#allocation6 + $0x2c0] sm:$0xff]
    %v590 = vld [vmem:[#allocation6 + $0x2c8] sm:$0xff]
    %v591 = vld [vmem:[#allocation6 + $0x2d0] sm:$0xff]
    %v592 = vld [vmem:[#allocation6 + $0x2d8] sm:$0xff]
    %v593 = vld [vmem:[#allocation6 + $0x2e0] sm:$0xff]
    %v594 = vld [vmem:[#allocation6 + $0x2e8] sm:$0xff]
    %v595 = vld [vmem:[#allocation6 + $0x2f0] sm:$0xff]
    %v596 = vld [vmem:[#allocation6 + $0x2f8] sm:$0xff]
    %v597 = vld [vmem:[#allocation6 + $0x300] sm:$0xff]
    %v598 = vld [vmem:[#allocation6 + $0x308] sm:$0xff]
    %v599 = vld [vmem:[#allocation6 + $0x310] sm:$0xff]
    %v600 = vld [vmem:[#allocation6 + $0x318] sm:$0xff]
    %v601 = vld [vmem:[#allocation6 + $0x320] sm:$0xff]
    %v602 = vld [vmem:[#allocation6 + $0x328] sm:$0xff]
    %v603 = vld [vmem:[#allocation6 + $0x330] sm:$0xff]
    %v604 = vld [vmem:[#allocation6 + $0x338] sm:$0xff]
    %v605 = vld [vmem:[#allocation6 + $0x340] sm:$0xff]
    %v606 = vld [vmem:[#allocation6 + $0x348] sm:$0xff]
    %v607 = vld [vmem:[#allocation6 + $0x350] sm:$0xff]
    %v608 = vld [vmem:[#allocation6 + $0x358] sm:$0xff]
    %v609 = vld [vmem:[#allocation6 + $0x360] sm:$0xff]
    %v610 = vld [vmem:[#allocation6 + $0x368] sm:$0xff]
    %v611 = vld [vmem:[#allocation6 + $0x370] sm:$0xff]
    %v612 = vld [vmem:[#allocation6 + $0x378] sm:$0xff]
    %v613 = vld [vmem:[#allocation6 + $0x380] sm:$0xff]
    %v614 = vld [vmem:[#allocation6 + $0x388] sm:$0xff]
    %v615 = vld [vmem:[#allocation6 + $0x390] sm:$0xff]
    %v616 = vld [vmem:[#allocation6 + $0x398] sm:$0xff]
    %v617 = vld [vmem:[#allocation6 + $0x3a0] sm:$0xff]
    %v618 = vld [vmem:[#allocation6 + $0x3a8] sm:$0xff]
    %v619 = vld [vmem:[#allocation6 + $0x3b0] sm:$0xff]
    %v620 = vld [vmem:[#allocation6 + $0x3b8] sm:$0xff]
    %v621 = vld [vmem:[#allocation6 + $0x3c0] sm:$0xff]
    %v622 = vld [vmem:[#allocation6 + $0x3c8] sm:$0xff]
    %v623 = vld [vmem:[#allocation6 + $0x3d0] sm:$0xff]
    %v624 = vld [vmem:[#allocation6 + $0x3d8] sm:$0xff]
    %v625 = vld [vmem:[#allocation6 + $0x3e0] sm:$0xff]
    %v626 = vld [vmem:[#allocation6 + $0x3e8] sm:$0xff]
    %v627 = vld [vmem:[#allocation6 + $0x3f0] sm:$0xff]
    %v628 = vld [vmem:[#allocation6 + $0x3f8] sm:$0xff]
    %v629 = vld [vmem:[#allocation6 + $0x400] sm:$0xff]
    %v630 = vld [vmem:[#allocation6 + $0x408] sm:$0xff]
    %v631 = vld [vmem:[#allocation6 + $0x410] sm:$0xff]
    %v632 = vld [vmem:[#allocation6 + $0x418] sm:$0xff]
    %v633 = vld [vmem:[#allocation6 + $0x420] sm:$0xff]
    %v634 = vld [vmem:[#allocation6 + $0x428] sm:$0xff]
    %v635 = vld [vmem:[#allocation6 + $0x430] sm:$0xff]
    %v636 = vld [vmem:[#allocation6 + $0x438] sm:$0xff]
    %v637 = vld [vmem:[#allocation6 + $0x440] sm:$0xff]
    %v638 = vld [vmem:[#allocation6 + $0x448] sm:$0xff]
    %v639 = vld [vmem:[#allocation6 + $0x450] sm:$0xff]
    %v640 = vld [vmem:[#allocation6 + $0x458] sm:$0xff]
    %v641 = vld [vmem:[#allocation6 + $0x460] sm:$0xff]
    %v642 = vld [vmem:[#allocation6 + $0x468] sm:$0xff]
    %v643 = vld [vmem:[#allocation6 + $0x470] sm:$0xff]
    %v644 = vld [vmem:[#allocation6 + $0x478] sm:$0xff]
    %v645 = vld [vmem:[#allocation6 + $0x480] sm:$0xff]
    %v646 = vld [vmem:[#allocation6 + $0x488] sm:$0xff]
    %v647 = vld [vmem:[#allocation6 + $0x490] sm:$0xff]
    %v648 = vld [vmem:[#allocation6 + $0x498] sm:$0xff]
    %v649 = vld [vmem:[#allocation6 + $0x4a0] sm:$0xff]
    %v650 = vld [vmem:[#allocation6 + $0x4a8] sm:$0xff]
    %v651 = vld [vmem:[#allocation6 + $0x4b0] sm:$0xff]
    %v652 = vld [vmem:[#allocation6 + $0x4b8] sm:$0xff]
    %v653 = vld [vmem:[#allocation6 + $0x4c0] sm:$0xff]
    %v654 = vld [vmem:[#allocation6 + $0x4c8] sm:$0xff]
    %v655 = vld [vmem:[#allocation6 + $0x4d0] sm:$0xff]
    %v656 = vld [vmem:[#allocation6 + $0x4d8] sm:$0xff]
    %v657 = vld [vmem:[#allocation6 + $0x4e0] sm:$0xff]
    %v658 = vld [vmem:[#allocation6 + $0x4e8] sm:$0xff]
    %v659 = vld [vmem:[#allocation6 + $0x4f0] sm:$0xff]
    %v660 = vld [vmem:[#allocation6 + $0x4f8] sm:$0xff]
    %v661 = vld [vmem:[#allocation6 + $0x500] sm:$0xff]
    %v662 = vld [vmem:[#allocation6 + $0x508] sm:$0xff]
    %v663 = vld [vmem:[#allocation6 + $0x510] sm:$0xff]
    %v664 = vld [vmem:[#allocation6 + $0x518] sm:$0xff]
    %v665 = vld [vmem:[#allocation6 + $0x520] sm:$0xff]
    %v666 = vld [vmem:[#allocation6 + $0x528] sm:$0xff]
    %v667 = vld [vmem:[#allocation6 + $0x530] sm:$0xff]
    %v668 = vld [vmem:[#allocation6 + $0x538] sm:$0xff]
    %v669 = vld [vmem:[#allocation6 + $0x540] sm:$0xff]
    %v670 = vld [vmem:[#allocation6 + $0x548] sm:$0xff]
    %v671 = vld [vmem:[#allocation6 + $0x550] sm:$0xff]
    %v672 = vld [vmem:[#allocation6 + $0x558] sm:$0xff]
    %v673 = vld [vmem:[#allocation6 + $0x560] sm:$0xff]
    %v674 = vld [vmem:[#allocation6 + $0x568] sm:$0xff]
    %v675 = vld [vmem:[#allocation6 + $0x570] sm:$0xff]
    %v676 = vld [vmem:[#allocation6 + $0x578] sm:$0xff]
    %v677 = vld [vmem:[#allocation6 + $0x580] sm:$0xff]
    %v678 = vld [vmem:[#allocation6 + $0x588] sm:$0xff]
    %v679 = vld [vmem:[#allocation6 + $0x590] sm:$0xff]
    %v680 = vld [vmem:[#allocation6 + $0x598] sm:$0xff]
    %v681 = vld [vmem:[#allocation6 + $0x5a0] sm:$0xff]
    %v682 = vld [vmem:[#allocation6 + $0x5a8] sm:$0xff]
    %v683 = vld [vmem:[#allocation6 + $0x5b0] sm:$0xff]
    %v684 = vld [vmem:[#allocation6 + $0x5b8] sm:$0xff]
    %v685 = vld [vmem:[#allocation6 + $0x5c0] sm:$0xff]
    %v686 = vld [vmem:[#allocation6 + $0x5c8] sm:$0xff]
    %v687 = vld [vmem:[#allocation6 + $0x5d0] sm:$0xff]
    %v688 = vld [vmem:[#allocation6 + $0x5d8] sm:$0xff]
    %v689 = vld [vmem:[#allocation6 + $0x5e0] sm:$0xff]
    %v690 = vld [vmem:[#allocation6 + $0x5e8] sm:$0xff]
    %v691 = vld [vmem:[#allocation6 + $0x5f0] sm:$0xff]
    %v692 = vld [vmem:[#allocation6 + $0x5f8] sm:$0xff]
    %v885 = vunpack.c.l.b16 %v501
    %v886 = vunpack.c.h.b16 %v501
    %v887 = vunpack.c.l.b16 %v502
    %v888 = vunpack.c.h.b16 %v502
    %v889 = vunpack.c.l.b16 %v503
    %v890 = vunpack.c.h.b16 %v503
    %v891 = vunpack.c.l.b16 %v504
    %v892 = vunpack.c.h.b16 %v504
    %v893 = vunpack.c.l.b16 %v505
    %v894 = vunpack.c.h.b16 %v505
    %v895 = vunpack.c.l.b16 %v506
    %v896 = vunpack.c.h.b16 %v506
    %v897 = vunpack.c.l.b16 %v507
    %v898 = vunpack.c.h.b16 %v507
    %v899 = vunpack.c.l.b16 %v508
    %v900 = vunpack.c.h.b16 %v508
    %v901 = vunpack.c.l.b16 %v509
    %v902 = vunpack.c.h.b16 %v509
    %v903 = vunpack.c.l.b16 %v510
    %v904 = vunpack.c.h.b16 %v510
    %v905 = vunpack.c.l.b16 %v511
    %v906 = vunpack.c.h.b16 %v511
    %v907 = vunpack.c.l.b16 %v512
    %v908 = vunpack.c.h.b16 %v512
    %v909 = vunpack.c.l.b16 %v513
    %v910 = vunpack.c.h.b16 %v513
    %v911 = vunpack.c.l.b16 %v514
    %v912 = vunpack.c.h.b16 %v514
    %v913 = vunpack.c.l.b16 %v515
    %v914 = vunpack.c.h.b16 %v515
    %v915 = vunpack.c.l.b16 %v516
    %v916 = vunpack.c.h.b16 %v516
    %v917 = vunpack.c.l.b16 %v517
    %v918 = vunpack.c.h.b16 %v517
    %v919 = vunpack.c.l.b16 %v518
    %v920 = vunpack.c.h.b16 %v518
    %v921 = vunpack.c.l.b16 %v519
    %v922 = vunpack.c.h.b16 %v519
    %v923 = vunpack.c.l.b16 %v520
    %v924 = vunpack.c.h.b16 %v520
    %v925 = vunpack.c.l.b16 %v521
    %v926 = vunpack.c.h.b16 %v521
    %v927 = vunpack.c.l.b16 %v522
    %v928 = vunpack.c.h.b16 %v522
    %v929 = vunpack.c.l.b16 %v523
    %v930 = vunpack.c.h.b16 %v523
    %v931 = vunpack.c.l.b16 %v524
    %v932 = vunpack.c.h.b16 %v524
    %v933 = vunpack.c.l.b16 %v525
    %v934 = vunpack.c.h.b16 %v525
    %v935 = vunpack.c.l.b16 %v526
    %v936 = vunpack.c.h.b16 %v526
    %v937 = vunpack.c.l.b16 %v527
    %v938 = vunpack.c.h.b16 %v527
    %v939 = vunpack.c.l.b16 %v528
    %v940 = vunpack.c.h.b16 %v528
    %v941 = vunpack.c.l.b16 %v529
    %v942 = vunpack.c.h.b16 %v529
    %v943 = vunpack.c.l.b16 %v530
    %v944 = vunpack.c.h.b16 %v530
    %v945 = vunpack.c.l.b16 %v531
    %v946 = vunpack.c.h.b16 %v531
    %v947 = vunpack.c.l.b16 %v532
    %v948 = vunpack.c.h.b16 %v532
    %v949 = vunpack.c.l.b16 %v533
    %v950 = vunpack.c.h.b16 %v533
    %v951 = vunpack.c.l.b16 %v534
    %v952 = vunpack.c.h.b16 %v534
    %v953 = vunpack.c.l.b16 %v535
    %v954 = vunpack.c.h.b16 %v535
    %v955 = vunpack.c.l.b16 %v536
    %v956 = vunpack.c.h.b16 %v536
    %v957 = vunpack.c.l.b16 %v537
    %v958 = vunpack.c.h.b16 %v537
    %v959 = vunpack.c.l.b16 %v538
    %v960 = vunpack.c.h.b16 %v538
    %v961 = vunpack.c.l.b16 %v539
    %v962 = vunpack.c.h.b16 %v539
    %v963 = vunpack.c.l.b16 %v540
    %v964 = vunpack.c.h.b16 %v540
    %v965 = vunpack.c.l.b16 %v541
    %v966 = vunpack.c.h.b16 %v541
    %v967 = vunpack.c.l.b16 %v542
    %v968 = vunpack.c.h.b16 %v542
    %v969 = vunpack.c.l.b16 %v543
    %v970 = vunpack.c.h.b16 %v543
    %v971 = vunpack.c.l.b16 %v544
    %v972 = vunpack.c.h.b16 %v544
    %v973 = vunpack.c.l.b16 %v545
    %v974 = vunpack.c.h.b16 %v545
    %v975 = vunpack.c.l.b16 %v546
    %v976 = vunpack.c.h.b16 %v546
    %v977 = vunpack.c.l.b16 %v547
    %v978 = vunpack.c.h.b16 %v547
    %v979 = vunpack.c.l.b16 %v548
    %v980 = vunpack.c.h.b16 %v548
    %v981 = vunpack.c.l.b16 %v549
    %v982 = vunpack.c.h.b16 %v549
    %v983 = vunpack.c.l.b16 %v550
    %v984 = vunpack.c.h.b16 %v550
    %v985 = vunpack.c.l.b16 %v551
    %v986 = vunpack.c.h.b16 %v551
    %v987 = vunpack.c.l.b16 %v552
    %v988 = vunpack.c.h.b16 %v552
    %v989 = vunpack.c.l.b16 %v553
    %v990 = vunpack.c.h.b16 %v553
    %v991 = vunpack.c.l.b16 %v554
    %v992 = vunpack.c.h.b16 %v554
    %v993 = vunpack.c.l.b16 %v555
    %v994 = vunpack.c.h.b16 %v555
    %v995 = vunpack.c.l.b16 %v556
    %v996 = vunpack.c.h.b16 %v556
    %v997 = vunpack.c.l.b16 %v557
    %v998 = vunpack.c.h.b16 %v557
    %v999 = vunpack.c.l.b16 %v558
    %v1000 = vunpack.c.h.b16 %v558
    %v1001 = vunpack.c.l.b16 %v559
    %v1002 = vunpack.c.h.b16 %v559
    %v1003 = vunpack.c.l.b16 %v560
    %v1004 = vunpack.c.h.b16 %v560
    %v1005 = vunpack.c.l.b16 %v561
    %v1006 = vunpack.c.h.b16 %v561
    %v1007 = vunpack.c.l.b16 %v562
    %v1008 = vunpack.c.h.b16 %v562
    %v1009 = vunpack.c.l.b16 %v563
    %v1010 = vunpack.c.h.b16 %v563
    %v1011 = vunpack.c.l.b16 %v564
    %v1012 = vunpack.c.h.b16 %v564
    %v1013 = vunpack.c.l.b16 %v565
    %v1014 = vunpack.c.h.b16 %v565
    %v1015 = vunpack.c.l.b16 %v566
    %v1016 = vunpack.c.h.b16 %v566
    %v1017 = vunpack.c.l.b16 %v567
    %v1018 = vunpack.c.h.b16 %v567
    %v1019 = vunpack.c.l.b16 %v568
    %v1020 = vunpack.c.h.b16 %v568
    %v1021 = vunpack.c.l.b16 %v569
    %v1022 = vunpack.c.h.b16 %v569
    %v1023 = vunpack.c.l.b16 %v570
    %v1024 = vunpack.c.h.b16 %v570
    %v1025 = vunpack.c.l.b16 %v571
    %v1026 = vunpack.c.h.b16 %v571
    %v1027 = vunpack.c.l.b16 %v572
    %v1028 = vunpack.c.h.b16 %v572
    %v1029 = vunpack.c.l.b16 %v573
    %v1030 = vunpack.c.h.b16 %v573
    %v1031 = vunpack.c.l.b16 %v574
    %v1032 = vunpack.c.h.b16 %v574
    %v1033 = vunpack.c.l.b16 %v575
    %v1034 = vunpack.c.h.b16 %v575
    %v1035 = vunpack.c.l.b16 %v576
    %v1036 = vunpack.c.h.b16 %v576
    %v1037 = vunpack.c.l.b16 %v577
    %v1038 = vunpack.c.h.b16 %v577
    %v1039 = vunpack.c.l.b16 %v578
    %v1040 = vunpack.c.h.b16 %v578
    %v1041 = vunpack.c.l.b16 %v579
    %v1042 = vunpack.c.h.b16 %v579
    %v1043 = vunpack.c.l.b16 %v580
    %v1044 = vunpack.c.h.b16 %v580
    %v1045 = vunpack.c.l.b16 %v581
    %v1046 = vunpack.c.h.b16 %v581
    %v1047 = vunpack.c.l.b16 %v582
    %v1048 = vunpack.c.h.b16 %v582
    %v1049 = vunpack.c.l.b16 %v583
    %v1050 = vunpack.c.h.b16 %v583
    %v1051 = vunpack.c.l.b16 %v584
    %v1052 = vunpack.c.h.b16 %v584
    %v1053 = vunpack.c.l.b16 %v585
    %v1054 = vunpack.c.h.b16 %v585
    %v1055 = vunpack.c.l.b16 %v586
    %v1056 = vunpack.c.h.b16 %v586
    %v1057 = vunpack.c.l.b16 %v587
    %v1058 = vunpack.c.h.b16 %v587
    %v1059 = vunpack.c.l.b16 %v588
    %v1060 = vunpack.c.h.b16 %v588
    %v1061 = vunpack.c.l.b16 %v589
    %v1062 = vunpack.c.h.b16 %v589
    %v1063 = vunpack.c.l.b16 %v590
    %v1064 = vunpack.c.h.b16 %v590
    %v1065 = vunpack.c.l.b16 %v591
    %v1066 = vunpack.c.h.b16 %v591
    %v1067 = vunpack.c.l.b16 %v592
    %v1068 = vunpack.c.h.b16 %v592
    %v1069 = vunpack.c.l.b16 %v593
    %v1070 = vunpack.c.h.b16 %v593
    %v1071 = vunpack.c.l.b16 %v594
    %v1072 = vunpack.c.h.b16 %v594
    %v1073 = vunpack.c.l.b16 %v595
    %v1074 = vunpack.c.h.b16 %v595
    %v1075 = vunpack.c.l.b16 %v596
    %v1076 = vunpack.c.h.b16 %v596
    %v1077 = vunpack.c.l.b16 %v597
    %v1078 = vunpack.c.h.b16 %v597
    %v1079 = vunpack.c.l.b16 %v598
    %v1080 = vunpack.c.h.b16 %v598
    %v1081 = vunpack.c.l.b16 %v599
    %v1082 = vunpack.c.h.b16 %v599
    %v1083 = vunpack.c.l.b16 %v600
    %v1084 = vunpack.c.h.b16 %v600
    %v1085 = vunpack.c.l.b16 %v601
    %v1086 = vunpack.c.h.b16 %v601
    %v1087 = vunpack.c.l.b16 %v602
    %v1088 = vunpack.c.h.b16 %v602
    %v1089 = vunpack.c.l.b16 %v603
    %v1090 = vunpack.c.h.b16 %v603
    %v1091 = vunpack.c.l.b16 %v604
    %v1092 = vunpack.c.h.b16 %v604
    %v1093 = vunpack.c.l.b16 %v605
    %v1094 = vunpack.c.h.b16 %v605
    %v1095 = vunpack.c.l.b16 %v606
    %v1096 = vunpack.c.h.b16 %v606
    %v1097 = vunpack.c.l.b16 %v607
    %v1098 = vunpack.c.h.b16 %v607
    %v1099 = vunpack.c.l.b16 %v608
    %v1100 = vunpack.c.h.b16 %v608
    %v1101 = vunpack.c.l.b16 %v609
    %v1102 = vunpack.c.h.b16 %v609
    %v1103 = vunpack.c.l.b16 %v610
    %v1104 = vunpack.c.h.b16 %v610
    %v1105 = vunpack.c.l.b16 %v611
    %v1106 = vunpack.c.h.b16 %v611
    %v1107 = vunpack.c.l.b16 %v612
    %v1108 = vunpack.c.h.b16 %v612
    %v1109 = vunpack.c.l.b16 %v613
    %v1110 = vunpack.c.h.b16 %v613
    %v1111 = vunpack.c.l.b16 %v614
    %v1112 = vunpack.c.h.b16 %v614
    %v1113 = vunpack.c.l.b16 %v615
    %v1114 = vunpack.c.h.b16 %v615
    %v1115 = vunpack.c.l.b16 %v616
    %v1116 = vunpack.c.h.b16 %v616
    %v1117 = vunpack.c.l.b16 %v617
    %v1118 = vunpack.c.h.b16 %v617
    %v1119 = vunpack.c.l.b16 %v618
    %v1120 = vunpack.c.h.b16 %v618
    %v1121 = vunpack.c.l.b16 %v619
    %v1122 = vunpack.c.h.b16 %v619
    %v1123 = vunpack.c.l.b16 %v620
    %v1124 = vunpack.c.h.b16 %v620
    %v1125 = vunpack.c.l.b16 %v621
    %v1126 = vunpack.c.h.b16 %v621
    %v1127 = vunpack.c.l.b16 %v622
    %v1128 = vunpack.c.h.b16 %v622
    %v1129 = vunpack.c.l.b16 %v623
    %v1130 = vunpack.c.h.b16 %v623
    %v1131 = vunpack.c.l.b16 %v624
    %v1132 = vunpack.c.h.b16 %v624
    %v1133 = vunpack.c.l.b16 %v625
    %v1134 = vunpack.c.h.b16 %v625
    %v1135 = vunpack.c.l.b16 %v626
    %v1136 = vunpack.c.h.b16 %v626
    %v1137 = vunpack.c.l.b16 %v627
    %v1138 = vunpack.c.h.b16 %v627
    %v1139 = vunpack.c.l.b16 %v628
    %v1140 = vunpack.c.h.b16 %v628
    %v1141 = vunpack.c.l.b16 %v629
    %v1142 = vunpack.c.h.b16 %v629
    %v1143 = vunpack.c.l.b16 %v630
    %v1144 = vunpack.c.h.b16 %v630
    %v1145 = vunpack.c.l.b16 %v631
    %v1146 = vunpack.c.h.b16 %v631
    %v1147 = vunpack.c.l.b16 %v632
    %v1148 = vunpack.c.h.b16 %v632
    %v1149 = vunpack.c.l.b16 %v633
    %v1150 = vunpack.c.h.b16 %v633
    %v1151 = vunpack.c.l.b16 %v634
    %v1152 = vunpack.c.h.b16 %v634
    %v1153 = vunpack.c.l.b16 %v635
    %v1154 = vunpack.c.h.b16 %v635
    %v1155 = vunpack.c.l.b16 %v636
    %v1156 = vunpack.c.h.b16 %v636
    %v1157 = vunpack.c.l.b16 %v637
    %v1158 = vunpack.c.h.b16 %v637
    %v1159 = vunpack.c.l.b16 %v638
    %v1160 = vunpack.c.h.b16 %v638
    %v1161 = vunpack.c.l.b16 %v639
    %v1162 = vunpack.c.h.b16 %v639
    %v1163 = vunpack.c.l.b16 %v640
    %v1164 = vunpack.c.h.b16 %v640
    %v1165 = vunpack.c.l.b16 %v641
    %v1166 = vunpack.c.h.b16 %v641
    %v1167 = vunpack.c.l.b16 %v642
    %v1168 = vunpack.c.h.b16 %v642
    %v1169 = vunpack.c.l.b16 %v643
    %v1170 = vunpack.c.h.b16 %v643
    %v1171 = vunpack.c.l.b16 %v644
    %v1172 = vunpack.c.h.b16 %v644
    %v1173 = vunpack.c.l.b16 %v645
    %v1174 = vunpack.c.h.b16 %v645
    %v1175 = vunpack.c.l.b16 %v646
    %v1176 = vunpack.c.h.b16 %v646
    %v1177 = vunpack.c.l.b16 %v647
    %v1178 = vunpack.c.h.b16 %v647
    %v1179 = vunpack.c.l.b16 %v648
    %v1180 = vunpack.c.h.b16 %v648
    %v1181 = vunpack.c.l.b16 %v649
    %v1182 = vunpack.c.h.b16 %v649
    %v1183 = vunpack.c.l.b16 %v650
    %v1184 = vunpack.c.h.b16 %v650
    %v1185 = vunpack.c.l.b16 %v651
    %v1186 = vunpack.c.h.b16 %v651
    %v1187 = vunpack.c.l.b16 %v652
    %v1188 = vunpack.c.h.b16 %v652
    %v1189 = vunpack.c.l.b16 %v653
    %v1190 = vunpack.c.h.b16 %v653
    %v1191 = vunpack.c.l.b16 %v654
    %v1192 = vunpack.c.h.b16 %v654
    %v1193 = vunpack.c.l.b16 %v655
    %v1194 = vunpack.c.h.b16 %v655
    %v1195 = vunpack.c.l.b16 %v656
    %v1196 = vunpack.c.h.b16 %v656
    %v1197 = vunpack.c.l.b16 %v657
    %v1198 = vunpack.c.h.b16 %v657
    %v1199 = vunpack.c.l.b16 %v658
    %v1200 = vunpack.c.h.b16 %v658
    %v1201 = vunpack.c.l.b16 %v659
    %v1202 = vunpack.c.h.b16 %v659
    %v1203 = vunpack.c.l.b16 %v660
    %v1204 = vunpack.c.h.b16 %v660
    %v1205 = vunpack.c.l.b16 %v661
    %v1206 = vunpack.c.h.b16 %v661
    %v1207 = vunpack.c.l.b16 %v662
    %v1208 = vunpack.c.h.b16 %v662
    %v1209 = vunpack.c.l.b16 %v663
    %v1210 = vunpack.c.h.b16 %v663
    %v1211 = vunpack.c.l.b16 %v664
    %v1212 = vunpack.c.h.b16 %v664
    %v1213 = vunpack.c.l.b16 %v665
    %v1214 = vunpack.c.h.b16 %v665
    %v1215 = vunpack.c.l.b16 %v666
    %v1216 = vunpack.c.h.b16 %v666
    %v1217 = vunpack.c.l.b16 %v667
    %v1218 = vunpack.c.h.b16 %v667
    %v1219 = vunpack.c.l.b16 %v668
    %v1220 = vunpack.c.h.b16 %v668
    %v1221 = vunpack.c.l.b16 %v669
    %v1222 = vunpack.c.h.b16 %v669
    %v1223 = vunpack.c.l.b16 %v670
    %v1224 = vunpack.c.h.b16 %v670
    %v1225 = vunpack.c.l.b16 %v671
    %v1226 = vunpack.c.h.b16 %v671
    %v1227 = vunpack.c.l.b16 %v672
    %v1228 = vunpack.c.h.b16 %v672
    %v1229 = vunpack.c.l.b16 %v673
    %v1230 = vunpack.c.h.b16 %v673
    %v1231 = vunpack.c.l.b16 %v674
    %v1232 = vunpack.c.h.b16 %v674
    %v1233 = vunpack.c.l.b16 %v675
    %v1234 = vunpack.c.h.b16 %v675
    %v1235 = vunpack.c.l.b16 %v676
    %v1236 = vunpack.c.h.b16 %v676
    %v1237 = vunpack.c.l.b16 %v677
    %v1238 = vunpack.c.h.b16 %v677
    %v1239 = vunpack.c.l.b16 %v678
    %v1240 = vunpack.c.h.b16 %v678
    %v1241 = vunpack.c.l.b16 %v679
    %v1242 = vunpack.c.h.b16 %v679
    %v1243 = vunpack.c.l.b16 %v680
    %v1244 = vunpack.c.h.b16 %v680
    %v1245 = vunpack.c.l.b16 %v681
    %v1246 = vunpack.c.h.b16 %v681
    %v1247 = vunpack.c.l.b16 %v682
    %v1248 = vunpack.c.h.b16 %v682
    %v1249 = vunpack.c.l.b16 %v683
    %v1250 = vunpack.c.h.b16 %v683
    %v1251 = vunpack.c.l.b16 %v684
    %v1252 = vunpack.c.h.b16 %v684
    %v1253 = vunpack.c.l.b16 %v685
    %v1254 = vunpack.c.h.b16 %v685
    %v1255 = vunpack.c.l.b16 %v686
    %v1256 = vunpack.c.h.b16 %v686
    %v1257 = vunpack.c.l.b16 %v687
    %v1258 = vunpack.c.h.b16 %v687
    %v1259 = vunpack.c.l.b16 %v688
    %v1260 = vunpack.c.h.b16 %v688
    %v1261 = vunpack.c.l.b16 %v689
    %v1262 = vunpack.c.h.b16 %v689
    %v1263 = vunpack.c.l.b16 %v690
    %v1264 = vunpack.c.h.b16 %v690
    %v1265 = vunpack.c.l.b16 %v691
    %v1266 = vunpack.c.h.b16 %v691
    %v1267 = vunpack.c.l.b16 %v692
    %v1268 = vunpack.c.h.b16 %v692
    %v1269 = vpack.c.b16 %v889, %v885
    %v1270 = vpack.c.b16 %v890, %v886
    %v1271 = vpack.c.b16 %v891, %v887
    %v1272 = vpack.c.b16 %v892, %v888
    %v1273 = vpack.c.b16 %v897, %v893
    %v1274 = vpack.c.b16 %v898, %v894
    %v1275 = vpack.c.b16 %v899, %v895
    %v1276 = vpack.c.b16 %v900, %v896
    %v1277 = vpack.c.b16 %v905, %v901
    %v1278 = vpack.c.b16 %v906, %v902
    %v1279 = vpack.c.b16 %v907, %v903
    %v1280 = vpack.c.b16 %v908, %v904
    %v1281 = vpack.c.b16 %v913, %v909
    %v1282 = vpack.c.b16 %v914, %v910
    %v1283 = vpack.c.b16 %v915, %v911
    %v1284 = vpack.c.b16 %v916, %v912
    %v1285 = vpack.c.b16 %v921, %v917
    %v1286 = vpack.c.b16 %v922, %v918
    %v1287 = vpack.c.b16 %v923, %v919
    %v1288 = vpack.c.b16 %v924, %v920
    %v1289 = vpack.c.b16 %v929, %v925
    %v1290 = vpack.c.b16 %v930, %v926
    %v1291 = vpack.c.b16 %v931, %v927
    %v1292 = vpack.c.b16 %v932, %v928
    %v1293 = vpack.c.b16 %v937, %v933
    %v1294 = vpack.c.b16 %v938, %v934
    %v1295 = vpack.c.b16 %v939, %v935
    %v1296 = vpack.c.b16 %v940, %v936
    %v1297 = vpack.c.b16 %v945, %v941
    %v1298 = vpack.c.b16 %v946, %v942
    %v1299 = vpack.c.b16 %v947, %v943
    %v1300 = vpack.c.b16 %v948, %v944
    %v1301 = vpack.c.b16 %v953, %v949
    %v1302 = vpack.c.b16 %v954, %v950
    %v1303 = vpack.c.b16 %v955, %v951
    %v1304 = vpack.c.b16 %v956, %v952
    %v1305 = vpack.c.b16 %v961, %v957
    %v1306 = vpack.c.b16 %v962, %v958
    %v1307 = vpack.c.b16 %v963, %v959
    %v1308 = vpack.c.b16 %v964, %v960
    %v1309 = vpack.c.b16 %v969, %v965
    %v1310 = vpack.c.b16 %v970, %v966
    %v1311 = vpack.c.b16 %v971, %v967
    %v1312 = vpack.c.b16 %v972, %v968
    %v1313 = vpack.c.b16 %v977, %v973
    %v1314 = vpack.c.b16 %v978, %v974
    %v1315 = vpack.c.b16 %v979, %v975
    %v1316 = vpack.c.b16 %v980, %v976
    %v1317 = vpack.c.b16 %v985, %v981
    %v1318 = vpack.c.b16 %v986, %v982
    %v1319 = vpack.c.b16 %v987, %v983
    %v1320 = vpack.c.b16 %v988, %v984
    %v1321 = vpack.c.b16 %v993, %v989
    %v1322 = vpack.c.b16 %v994, %v990
    %v1323 = vpack.c.b16 %v995, %v991
    %v1324 = vpack.c.b16 %v996, %v992
    %v1325 = vpack.c.b16 %v1001, %v997
    %v1326 = vpack.c.b16 %v1002, %v998
    %v1327 = vpack.c.b16 %v1003, %v999
    %v1328 = vpack.c.b16 %v1004, %v1000
    %v1329 = vpack.c.b16 %v1009, %v1005
    %v1330 = vpack.c.b16 %v1010, %v1006
    %v1331 = vpack.c.b16 %v1011, %v1007
    %v1332 = vpack.c.b16 %v1012, %v1008
    %v1333 = vpack.c.b16 %v1017, %v1013
    %v1334 = vpack.c.b16 %v1018, %v1014
    %v1335 = vpack.c.b16 %v1019, %v1015
    %v1336 = vpack.c.b16 %v1020, %v1016
    %v1337 = vpack.c.b16 %v1025, %v1021
    %v1338 = vpack.c.b16 %v1026, %v1022
    %v1339 = vpack.c.b16 %v1027, %v1023
    %v1340 = vpack.c.b16 %v1028, %v1024
    %v1341 = vpack.c.b16 %v1033, %v1029
    %v1342 = vpack.c.b16 %v1034, %v1030
    %v1343 = vpack.c.b16 %v1035, %v1031
    %v1344 = vpack.c.b16 %v1036, %v1032
    %v1345 = vpack.c.b16 %v1041, %v1037
    %v1346 = vpack.c.b16 %v1042, %v1038
    %v1347 = vpack.c.b16 %v1043, %v1039
    %v1348 = vpack.c.b16 %v1044, %v1040
    %v1349 = vpack.c.b16 %v1049, %v1045
    %v1350 = vpack.c.b16 %v1050, %v1046
    %v1351 = vpack.c.b16 %v1051, %v1047
    %v1352 = vpack.c.b16 %v1052, %v1048
    %v1353 = vpack.c.b16 %v1057, %v1053
    %v1354 = vpack.c.b16 %v1058, %v1054
    %v1355 = vpack.c.b16 %v1059, %v1055
    %v1356 = vpack.c.b16 %v1060, %v1056
    %v1357 = vpack.c.b16 %v1065, %v1061
    %v1358 = vpack.c.b16 %v1066, %v1062
    %v1359 = vpack.c.b16 %v1067, %v1063
    %v1360 = vpack.c.b16 %v1068, %v1064
    %v1361 = vpack.c.b16 %v1073, %v1069
    %v1362 = vpack.c.b16 %v1074, %v1070
    %v1363 = vpack.c.b16 %v1075, %v1071
    %v1364 = vpack.c.b16 %v1076, %v1072
    %v1365 = vpack.c.b16 %v1081, %v1077
    %v1366 = vpack.c.b16 %v1082, %v1078
    %v1367 = vpack.c.b16 %v1083, %v1079
    %v1368 = vpack.c.b16 %v1084, %v1080
    %v1369 = vpack.c.b16 %v1089, %v1085
    %v1370 = vpack.c.b16 %v1090, %v1086
    %v1371 = vpack.c.b16 %v1091, %v1087
    %v1372 = vpack.c.b16 %v1092, %v1088
    %v1373 = vpack.c.b16 %v1097, %v1093
    %v1374 = vpack.c.b16 %v1098, %v1094
    %v1375 = vpack.c.b16 %v1099, %v1095
    %v1376 = vpack.c.b16 %v1100, %v1096
    %v1377 = vpack.c.b16 %v1105, %v1101
    %v1378 = vpack.c.b16 %v1106, %v1102
    %v1379 = vpack.c.b16 %v1107, %v1103
    %v1380 = vpack.c.b16 %v1108, %v1104
    %v1381 = vpack.c.b16 %v1113, %v1109
    %v1382 = vpack.c.b16 %v1114, %v1110
    %v1383 = vpack.c.b16 %v1115, %v1111
    %v1384 = vpack.c.b16 %v1116, %v1112
    %v1385 = vpack.c.b16 %v1121, %v1117
    %v1386 = vpack.c.b16 %v1122, %v1118
    %v1387 = vpack.c.b16 %v1123, %v1119
    %v1388 = vpack.c.b16 %v1124, %v1120
    %v1389 = vpack.c.b16 %v1129, %v1125
    %v1390 = vpack.c.b16 %v1130, %v1126
    %v1391 = vpack.c.b16 %v1131, %v1127
    %v1392 = vpack.c.b16 %v1132, %v1128
    %v1393 = vpack.c.b16 %v1137, %v1133
    %v1394 = vpack.c.b16 %v1138, %v1134
    %v1395 = vpack.c.b16 %v1139, %v1135
    %v1396 = vpack.c.b16 %v1140, %v1136
    %v1397 = vpack.c.b16 %v1145, %v1141
    %v1398 = vpack.c.b16 %v1146, %v1142
    %v1399 = vpack.c.b16 %v1147, %v1143
    %v1400 = vpack.c.b16 %v1148, %v1144
    %v1401 = vpack.c.b16 %v1153, %v1149
    %v1402 = vpack.c.b16 %v1154, %v1150
    %v1403 = vpack.c.b16 %v1155, %v1151
    %v1404 = vpack.c.b16 %v1156, %v1152
    %v1405 = vpack.c.b16 %v1161, %v1157
    %v1406 = vpack.c.b16 %v1162, %v1158
    %v1407 = vpack.c.b16 %v1163, %v1159
    %v1408 = vpack.c.b16 %v1164, %v1160
    %v1409 = vpack.c.b16 %v1169, %v1165
    %v1410 = vpack.c.b16 %v1170, %v1166
    %v1411 = vpack.c.b16 %v1171, %v1167
    %v1412 = vpack.c.b16 %v1172, %v1168
    %v1413 = vpack.c.b16 %v1177, %v1173
    %v1414 = vpack.c.b16 %v1178, %v1174
    %v1415 = vpack.c.b16 %v1179, %v1175
    %v1416 = vpack.c.b16 %v1180, %v1176
    %v1417 = vpack.c.b16 %v1185, %v1181
    %v1418 = vpack.c.b16 %v1186, %v1182
    %v1419 = vpack.c.b16 %v1187, %v1183
    %v1420 = vpack.c.b16 %v1188, %v1184
    %v1421 = vpack.c.b16 %v1193, %v1189
    %v1422 = vpack.c.b16 %v1194, %v1190
    %v1423 = vpack.c.b16 %v1195, %v1191
    %v1424 = vpack.c.b16 %v1196, %v1192
    %v1425 = vpack.c.b16 %v1201, %v1197
    %v1426 = vpack.c.b16 %v1202, %v1198
    %v1427 = vpack.c.b16 %v1203, %v1199
    %v1428 = vpack.c.b16 %v1204, %v1200
    %v1429 = vpack.c.b16 %v1209, %v1205
    %v1430 = vpack.c.b16 %v1210, %v1206
    %v1431 = vpack.c.b16 %v1211, %v1207
    %v1432 = vpack.c.b16 %v1212, %v1208
    %v1433 = vpack.c.b16 %v1217, %v1213
    %v1434 = vpack.c.b16 %v1218, %v1214
    %v1435 = vpack.c.b16 %v1219, %v1215
    %v1436 = vpack.c.b16 %v1220, %v1216
    %v1437 = vpack.c.b16 %v1225, %v1221
    %v1438 = vpack.c.b16 %v1226, %v1222
    %v1439 = vpack.c.b16 %v1227, %v1223
    %v1440 = vpack.c.b16 %v1228, %v1224
    %v1441 = vpack.c.b16 %v1233, %v1229
    %v1442 = vpack.c.b16 %v1234, %v1230
    %v1443 = vpack.c.b16 %v1235, %v1231
    %v1444 = vpack.c.b16 %v1236, %v1232
    %v1445 = vpack.c.b16 %v1241, %v1237
    %v1446 = vpack.c.b16 %v1242, %v1238
    %v1447 = vpack.c.b16 %v1243, %v1239
    %v1448 = vpack.c.b16 %v1244, %v1240
    %v1449 = vpack.c.b16 %v1249, %v1245
    %v1450 = vpack.c.b16 %v1250, %v1246
    %v1451 = vpack.c.b16 %v1251, %v1247
    %v1452 = vpack.c.b16 %v1252, %v1248
    %v1453 = vpack.c.b16 %v1257, %v1253
    %v1454 = vpack.c.b16 %v1258, %v1254
    %v1455 = vpack.c.b16 %v1259, %v1255
    %v1456 = vpack.c.b16 %v1260, %v1256
    %v1457 = vpack.c.b16 %v1265, %v1261
    %v1458 = vpack.c.b16 %v1266, %v1262
    %v1459 = vpack.c.b16 %v1267, %v1263
    %v1460 = vpack.c.b16 %v1268, %v1264
    %1653 = vmatprep.subr.bf16.mxu0 %v1270
    %1654 = vmatpush1.bf16.msra.mxu0 %v1269
    %1655 = vmatprep.subr.bf16.mxu0 %v1274
    %1656 = vmatpush1.bf16.msra.mxu0 %v1273
    %1657 = vmatprep.subr.bf16.mxu0 %v1278
    %1658 = vmatpush1.bf16.msra.mxu0 %v1277
    %1659 = vmatprep.subr.bf16.mxu0 %v1282
    %1660 = vmatpush1.bf16.msra.mxu0 %v1281
    %1661 = vmatprep.subr.bf16.mxu0 %v1286
    %1662 = vmatpush1.bf16.msra.mxu0 %v1285
    %1663 = vmatprep.subr.bf16.mxu0 %v1290
    %1664 = vmatpush1.bf16.msra.mxu0 %v1289
    %1665 = vmatprep.subr.bf16.mxu0 %v1294
    %1666 = vmatpush1.bf16.msra.mxu0 %v1293
    %1667 = vmatprep.subr.bf16.mxu0 %v1298
    %1668 = vmatpush1.bf16.msra.mxu0 %v1297
    %1669 = vmatprep.subr.bf16.mxu0 %v1302
    %1670 = vmatpush1.bf16.msra.mxu0 %v1301
    %1671 = vmatprep.subr.bf16.mxu0 %v1306
    %1672 = vmatpush1.bf16.msra.mxu0 %v1305
    %1673 = vmatprep.subr.bf16.mxu0 %v1310
    %1674 = vmatpush1.bf16.msra.mxu0 %v1309
    %1675 = vmatprep.subr.bf16.mxu0 %v1314
    %1676 = vmatpush1.bf16.msra.mxu0 %v1313
    %1677 = vmatprep.subr.bf16.mxu0 %v1318
    %1678 = vmatpush1.bf16.msra.mxu0 %v1317
    %1679 = vmatprep.subr.bf16.mxu0 %v1322
    %1680 = vmatpush1.bf16.msra.mxu0 %v1321
    %1681 = vmatprep.subr.bf16.mxu0 %v1326
    %1682 = vmatpush1.bf16.msra.mxu0 %v1325
    %1683 = vmatprep.subr.bf16.mxu0 %v1330
    %1684 = vmatpush1.bf16.msra.mxu0 %v1329
    %1685 = vmatprep.mubr.bf16.mxu0 %v496
    %1686 = vmatmul.mubr.bf16.gmra.mrb[0].mxu0 %v495
    %v1687 = vpop.f32.mrb[0].mxu0
    %v1688 = vadd.f32 %v209, %v1687
    %v1689 = vpop.f32.mrb[0].mxu0
    %v1690 = vadd.f32 %v210, %v1689
    %v1691 = vpop.f32.mrb[0].mxu0
    %v1692 = vpop.f32.mrb[0].mxu0
    %1693 = vdwg.mxu0
    %1694 = vmatprep.subr.bf16.mxu0 %v1334
    %1695 = vmatpush1.bf16.msra.mxu0 %v1333
    %1696 = vmatprep.subr.bf16.mxu0 %v1338
    %1697 = vmatpush1.bf16.msra.mxu0 %v1337
    %1698 = vmatprep.subr.bf16.mxu0 %v1342
    %1699 = vmatpush1.bf16.msra.mxu0 %v1341
    %1700 = vmatprep.subr.bf16.mxu0 %v1346
    %1701 = vmatpush1.bf16.msra.mxu0 %v1345
    %1702 = vmatprep.subr.bf16.mxu0 %v1350
    %1703 = vmatpush1.bf16.msra.mxu0 %v1349
    %1704 = vmatprep.subr.bf16.mxu0 %v1354
    %1705 = vmatpush1.bf16.msra.mxu0 %v1353
    %1706 = vmatprep.subr.bf16.mxu0 %v1358
    %1707 = vmatpush1.bf16.msra.mxu0 %v1357
    %1708 = vmatprep.subr.bf16.mxu0 %v1362
    %1709 = vmatpush1.bf16.msra.mxu0 %v1361
    %1710 = vmatprep.subr.bf16.mxu0 %v1366
    %1711 = vmatpush1.bf16.msra.mxu0 %v1365
    %1712 = vmatprep.subr.bf16.mxu0 %v1370
    %1713 = vmatpush1.bf16.msra.mxu0 %v1369
    %1714 = vmatprep.subr.bf16.mxu0 %v1374
    %1715 = vmatpush1.bf16.msra.mxu0 %v1373
    %1716 = vmatprep.subr.bf16.mxu0 %v1378
    %1717 = vmatpush1.bf16.msra.mxu0 %v1377
    %1718 = vmatprep.subr.bf16.mxu0 %v1382
    %1719 = vmatpush1.bf16.msra.mxu0 %v1381
    %1720 = vmatprep.subr.bf16.mxu0 %v1386
    %1721 = vmatpush1.bf16.msra.mxu0 %v1385
    %1722 = vmatprep.subr.bf16.mxu0 %v1390
    %1723 = vmatpush1.bf16.msra.mxu0 %v1389
    %1724 = vmatprep.subr.bf16.mxu0 %v1394
    %1725 = vmatpush1.bf16.msra.mxu0 %v1393
    %1726 = vmatprep.mubr.bf16.mxu0 %v498
    %1727 = vmatmul.mubr.bf16.gmra.mrb[0].mxu0 %v497
    %v1728 = vpop.f32.mrb[0].mxu0
    %v1729 = vadd.f32 %v1688, %v1728
    %v1730 = vpop.f32.mrb[0].mxu0
    %v1731 = vadd.f32 %v1690, %v1730
    %v1732 = vpop.f32.mrb[0].mxu0
    %v1733 = vpop.f32.mrb[0].mxu0
    %1734 = vdwg.mxu0
    %1735 = vmatprep.subr.bf16.mxu0 %v1398
    %1736 = vmatpush1.bf16.msra.mxu0 %v1397
    %1737 = vmatprep.subr.bf16.mxu0 %v1402
    %1738 = vmatpush1.bf16.msra.mxu0 %v1401
    %1739 = vmatprep.subr.bf16.mxu0 %v1406
    %1740 = vmatpush1.bf16.msra.mxu0 %v1405
    %1741 = vmatprep.subr.bf16.mxu0 %v1410
    %1742 = vmatpush1.bf16.msra.mxu0 %v1409
    %1743 = vmatprep.subr.bf16.mxu0 %v1414
    %1744 = vmatpush1.bf16.msra.mxu0 %v1413
    %1745 = vmatprep.subr.bf16.mxu0 %v1418
    %1746 = vmatpush1.bf16.msra.mxu0 %v1417
    %1747 = vmatprep.subr.bf16.mxu0 %v1422
    %1748 = vmatpush1.bf16.msra.mxu0 %v1421
    %1749 = vmatprep.subr.bf16.mxu0 %v1426
    %1750 = vmatpush1.bf16.msra.mxu0 %v1425
    %1751 = vmatprep.subr.bf16.mxu0 %v1430
    %1752 = vmatpush1.bf16.msra.mxu0 %v1429
    %1753 = vmatprep.subr.bf16.mxu0 %v1434
    %1754 = vmatpush1.bf16.msra.mxu0 %v1433
    %1755 = vmatprep.subr.bf16.mxu0 %v1438
    %1756 = vmatpush1.bf16.msra.mxu0 %v1437
    %1757 = vmatprep.subr.bf16.mxu0 %v1442
    %1758 = vmatpush1.bf16.msra.mxu0 %v1441
    %1759 = vmatprep.subr.bf16.mxu0 %v1446
    %1760 = vmatpush1.bf16.msra.mxu0 %v1445
    %1761 = vmatprep.subr.bf16.mxu0 %v1450
    %1762 = vmatpush1.bf16.msra.mxu0 %v1449
    %1763 = vmatprep.subr.bf16.mxu0 %v1454
    %1764 = vmatpush1.bf16.msra.mxu0 %v1453
    %1765 = vmatprep.subr.bf16.mxu0 %v1458
    %1766 = vmatpush1.bf16.msra.mxu0 %v1457
    %1767 = vmatprep.mubr.bf16.mxu0 %v500
    %1768 = vmatmul.mubr.bf16.gmra.mrb[0].mxu0 %v499
    %v1769 = vpop.f32.mrb[0].mxu0
    %v1770 = vadd.f32 %v1729, %v1769
    %v1771 = vpop.f32.mrb[0].mxu0
    %v1772 = vadd.f32 %v1731, %v1771
    %v1773 = vpop.f32.mrb[0].mxu0
    %v1774 = vpop.f32.mrb[0].mxu0
    %1775 = vdwg.mxu0
    %1776 = vmatprep.subr.bf16.mxu0 %v1272
    %1777 = vmatpush1.bf16.msra.mxu0 %v1271
    %1778 = vmatprep.subr.bf16.mxu0 %v1276
    %1779 = vmatpush1.bf16.msra.mxu0 %v1275
    %1780 = vmatprep.subr.bf16.mxu0 %v1280
    %1781 = vmatpush1.bf16.msra.mxu0 %v1279
    %1782 = vmatprep.subr.bf16.mxu0 %v1284
    %1783 = vmatpush1.bf16.msra.mxu0 %v1283
    %1784 = vmatprep.subr.bf16.mxu0 %v1288
    %1785 = vmatpush1.bf16.msra.mxu0 %v1287
    %1786 = vmatprep.subr.bf16.mxu0 %v1292
    %1787 = vmatpush1.bf16.msra.mxu0 %v1291
    %1788 = vmatprep.subr.bf16.mxu0 %v1296
    %1789 = vmatpush1.bf16.msra.mxu0 %v1295
    %1790 = vmatprep.subr.bf16.mxu0 %v1300
    %1791 = vmatpush1.bf16.msra.mxu0 %v1299
    %1792 = vmatprep.subr.bf16.mxu0 %v1304
    %1793 = vmatpush1.bf16.msra.mxu0 %v1303
    %1794 = vmatprep.subr.bf16.mxu0 %v1308
    %1795 = vmatpush1.bf16.msra.mxu0 %v1307
    %1796 = vmatprep.subr.bf16.mxu0 %v1312
    %1797 = vmatpush1.bf16.msra.mxu0 %v1311
    %1798 = vmatprep.subr.bf16.mxu0 %v1316
    %1799 = vmatpush1.bf16.msra.mxu0 %v1315
    %1800 = vmatprep.subr.bf16.mxu0 %v1320
    %1801 = vmatpush1.bf16.msra.mxu0 %v1319
    %1802 = vmatprep.subr.bf16.mxu0 %v1324
    %1803 = vmatpush1.bf16.msra.mxu0 %v1323
    %1804 = vmatprep.subr.bf16.mxu0 %v1328
    %1805 = vmatpush1.bf16.msra.mxu0 %v1327
    %1806 = vmatprep.subr.bf16.mxu0 %v1332
    %1807 = vmatpush1.bf16.msra.mxu0 %v1331
    %1808 = vmatprep.mubr.bf16.mxu0 %v496
    %1809 = vmatmul.mubr.bf16.gmra.mrb[0].mxu0 %v495
    %v1810 = vpop.f32.mrb[0].mxu0
    %v1811 = vadd.f32 %v211, %v1810
    %v1812 = vpop.f32.mrb[0].mxu0
    %v1813 = vadd.f32 %v212, %v1812
    %v1814 = vpop.f32.mrb[0].mxu0
    %v1815 = vpop.f32.mrb[0].mxu0
    %1816 = vdwg.mxu0
    %1817 = vmatprep.subr.bf16.mxu0 %v1336
    %1818 = vmatpush1.bf16.msra.mxu0 %v1335
    %1819 = vmatprep.subr.bf16.mxu0 %v1340
    %1820 = vmatpush1.bf16.msra.mxu0 %v1339
    %1821 = vmatprep.subr.bf16.mxu0 %v1344
    %1822 = vmatpush1.bf16.msra.mxu0 %v1343
    %1823 = vmatprep.subr.bf16.mxu0 %v1348
    %1824 = vmatpush1.bf16.msra.mxu0 %v1347
    %1825 = vmatprep.subr.bf16.mxu0 %v1352
    %1826 = vmatpush1.bf16.msra.mxu0 %v1351
    %1827 = vmatprep.subr.bf16.mxu0 %v1356
    %1828 = vmatpush1.bf16.msra.mxu0 %v1355
    %1829 = vmatprep.subr.bf16.mxu0 %v1360
    %1830 = vmatpush1.bf16.msra.mxu0 %v1359
    %1831 = vmatprep.subr.bf16.mxu0 %v1364
    %1832 = vmatpush1.bf16.msra.mxu0 %v1363
    %1833 = vmatprep.subr.bf16.mxu0 %v1368
    %1834 = vmatpush1.bf16.msra.mxu0 %v1367
    %1835 = vmatprep.subr.bf16.mxu0 %v1372
    %1836 = vmatpush1.bf16.msra.mxu0 %v1371
    %1837 = vmatprep.subr.bf16.mxu0 %v1376
    %1838 = vmatpush1.bf16.msra.mxu0 %v1375
    %1839 = vmatprep.subr.bf16.mxu0 %v1380
    %1840 = vmatpush1.bf16.msra.mxu0 %v1379
    %1841 = vmatprep.subr.bf16.mxu0 %v1384
    %1842 = vmatpush1.bf16.msra.mxu0 %v1383
    %1843 = vmatprep.subr.bf16.mxu0 %v1388
    %1844 = vmatpush1.bf16.msra.mxu0 %v1387
    %1845 = vmatprep.subr.bf16.mxu0 %v1392
    %1846 = vmatpush1.bf16.msra.mxu0 %v1391
    %1847 = vmatprep.subr.bf16.mxu0 %v1396
    %1848 = vmatpush1.bf16.msra.mxu0 %v1395
    %1849 = vmatprep.mubr.bf16.mxu0 %v498
    %1850 = vmatmul.mubr.bf16.gmra.mrb[0].mxu0 %v497
    %v1851 = vpop.f32.mrb[0].mxu0
    %v1852 = vadd.f32 %v1811, %v1851
    %v1853 = vpop.f32.mrb[0].mxu0
    %v1854 = vadd.f32 %v1813, %v1853
    %v1855 = vpop.f32.mrb[0].mxu0
    %v1856 = vpop.f32.mrb[0].mxu0
    %1857 = vdwg.mxu0
    %1858 = vmatprep.subr.bf16.mxu0 %v1400
    %1859 = vmatpush1.bf16.msra.mxu0 %v1399
    %1860 = vmatprep.subr.bf16.mxu0 %v1404
    %1861 = vmatpush1.bf16.msra.mxu0 %v1403
    %1862 = vmatprep.subr.bf16.mxu0 %v1408
    %1863 = vmatpush1.bf16.msra.mxu0 %v1407
    %1864 = vmatprep.subr.bf16.mxu0 %v1412
    %1865 = vmatpush1.bf16.msra.mxu0 %v1411
    %1866 = vmatprep.subr.bf16.mxu0 %v1416
    %1867 = vmatpush1.bf16.msra.mxu0 %v1415
    %1868 = vmatprep.subr.bf16.mxu0 %v1420
    %1869 = vmatpush1.bf16.msra.mxu0 %v1419
    %1870 = vmatprep.subr.bf16.mxu0 %v1424
    %1871 = vmatpush1.bf16.msra.mxu0 %v1423
    %1872 = vmatprep.subr.bf16.mxu0 %v1428
    %1873 = vmatpush1.bf16.msra.mxu0 %v1427
    %1874 = vmatprep.subr.bf16.mxu0 %v1432
    %1875 = vmatpush1.bf16.msra.mxu0 %v1431
    %1876 = vmatprep.subr.bf16.mxu0 %v1436
    %1877 = vmatpush1.bf16.msra.mxu0 %v1435
    %1878 = vmatprep.subr.bf16.mxu0 %v1440
    %1879 = vmatpush1.bf16.msra.mxu0 %v1439
    %1880 = vmatprep.subr.bf16.mxu0 %v1444
    %1881 = vmatpush1.bf16.msra.mxu0 %v1443
    %1882 = vmatprep.subr.bf16.mxu0 %v1448
    %1883 = vmatpush1.bf16.msra.mxu0 %v1447
    %1884 = vmatprep.subr.bf16.mxu0 %v1452
    %1885 = vmatpush1.bf16.msra.mxu0 %v1451
    %1886 = vmatprep.subr.bf16.mxu0 %v1456
    %1887 = vmatpush1.bf16.msra.mxu0 %v1455
    %1888 = vmatprep.subr.bf16.mxu0 %v1460
    %1889 = vmatpush1.bf16.msra.mxu0 %v1459
    %1890 = vmatprep.mubr.bf16.mxu0 %v500
    %1891 = vmatmul.mubr.bf16.gmra.mrb[0].mxu0 %v499
    %v1892 = vpop.f32.mrb[0].mxu0
    %v1893 = vadd.f32 %v1852, %v1892
    %v1894 = vpop.f32.mrb[0].mxu0
    %v1895 = vadd.f32 %v1854, %v1894
    %v1896 = vpop.f32.mrb[0].mxu0
    %v1897 = vpop.f32.mrb[0].mxu0
    %1898 = vdwg.mxu0
    %v1899 = vmax.f32 %v1770, 0.0
    %v1900 = vmax.f32 %v1772, 0.0
    %v1901 = vmax.f32 %v1893, 0.0
    %v1902 = vmax.f32 %v1895, 0.0
    %v1903 = vpack.c.bf16 %v1899, %v1899
    %v1904 = vpack.c.bf16 %v1900, %v1900
    %v1905 = vpack.c.bf16 %v1901, %v1901
    %v1906 = vpack.c.bf16 %v1902, %v1902
    %v1907 = vld [vmem:[#allocation7] sm:$0xff]
    %v1908 = vld [vmem:[#allocation7 + $0x8] sm:$0xff]
    %v1909 = vld [vmem:[#allocation7 + $0x10] sm:$0xff]
    %v1910 = vld [vmem:[#allocation7 + $0x18] sm:$0xff]
    %v1911 = vld [vmem:[#allocation7 + $0x20] sm:$0xff]
    %v1912 = vld [vmem:[#allocation7 + $0x28] sm:$0xff]
    %v1913 = vld [vmem:[#allocation7 + $0x30] sm:$0xff]
    %v1914 = vld [vmem:[#allocation7 + $0x38] sm:$0xff]
    %v1915 = vld [vmem:[#allocation7 + $0x40] sm:$0xff]
    %v1916 = vld [vmem:[#allocation7 + $0x48] sm:$0xff]
    %v1917 = vld [vmem:[#allocation7 + $0x50] sm:$0xff]
    %v1918 = vld [vmem:[#allocation7 + $0x58] sm:$0xff]
    %v1919 = vld [vmem:[#allocation7 + $0x60] sm:$0xff]
    %v1920 = vld [vmem:[#allocation7 + $0x68] sm:$0xff]
    %v1921 = vld [vmem:[#allocation7 + $0x70] sm:$0xff]
    %v1922 = vld [vmem:[#allocation7 + $0x78] sm:$0xff]
    %v1923 = vld [vmem:[#allocation7 + $0x80] sm:$0xff]
    %v1924 = vld [vmem:[#allocation7 + $0x88] sm:$0xff]
    %v1925 = vld [vmem:[#allocation7 + $0x90] sm:$0xff]
    %v1926 = vld [vmem:[#allocation7 + $0x98] sm:$0xff]
    %v1927 = vld [vmem:[#allocation7 + $0xa0] sm:$0xff]
    %v1928 = vld [vmem:[#allocation7 + $0xa8] sm:$0xff]
    %v1929 = vld [vmem:[#allocation7 + $0xb0] sm:$0xff]
    %v1930 = vld [vmem:[#allocation7 + $0xb8] sm:$0xff]
    %v1931 = vld [vmem:[#allocation7 + $0xc0] sm:$0xff]
    %v1932 = vld [vmem:[#allocation7 + $0xc8] sm:$0xff]
    %v1933 = vld [vmem:[#allocation7 + $0xd0] sm:$0xff]
    %v1934 = vld [vmem:[#allocation7 + $0xd8] sm:$0xff]
    %v1935 = vld [vmem:[#allocation7 + $0xe0] sm:$0xff]
    %v1936 = vld [vmem:[#allocation7 + $0xe8] sm:$0xff]
    %v1937 = vld [vmem:[#allocation7 + $0xf0] sm:$0xff]
    %v1938 = vld [vmem:[#allocation7 + $0xf8] sm:$0xff]
    %v1939 = vld [vmem:[#allocation7 + $0x100] sm:$0xff]
    %v1940 = vld [vmem:[#allocation7 + $0x108] sm:$0xff]
    %v1941 = vld [vmem:[#allocation7 + $0x110] sm:$0xff]
    %v1942 = vld [vmem:[#allocation7 + $0x118] sm:$0xff]
    %v1943 = vld [vmem:[#allocation7 + $0x120] sm:$0xff]
    %v1944 = vld [vmem:[#allocation7 + $0x128] sm:$0xff]
    %v1945 = vld [vmem:[#allocation7 + $0x130] sm:$0xff]
    %v1946 = vld [vmem:[#allocation7 + $0x138] sm:$0xff]
    %v1947 = vld [vmem:[#allocation7 + $0x140] sm:$0xff]
    %v1948 = vld [vmem:[#allocation7 + $0x148] sm:$0xff]
    %v1949 = vld [vmem:[#allocation7 + $0x150] sm:$0xff]
    %v1950 = vld [vmem:[#allocation7 + $0x158] sm:$0xff]
    %v1951 = vld [vmem:[#allocation7 + $0x160] sm:$0xff]
    %v1952 = vld [vmem:[#allocation7 + $0x168] sm:$0xff]
    %v1953 = vld [vmem:[#allocation7 + $0x170] sm:$0xff]
    %v1954 = vld [vmem:[#allocation7 + $0x178] sm:$0xff]
    %v1955 = vld [vmem:[#allocation7 + $0x180] sm:$0xff]
    %v1956 = vld [vmem:[#allocation7 + $0x188] sm:$0xff]
    %v1957 = vld [vmem:[#allocation7 + $0x190] sm:$0xff]
    %v1958 = vld [vmem:[#allocation7 + $0x198] sm:$0xff]
    %v1959 = vld [vmem:[#allocation7 + $0x1a0] sm:$0xff]
    %v1960 = vld [vmem:[#allocation7 + $0x1a8] sm:$0xff]
    %v1961 = vld [vmem:[#allocation7 + $0x1b0] sm:$0xff]
    %v1962 = vld [vmem:[#allocation7 + $0x1b8] sm:$0xff]
    %v1963 = vld [vmem:[#allocation7 + $0x1c0] sm:$0xff]
    %v1964 = vld [vmem:[#allocation7 + $0x1c8] sm:$0xff]
    %v1965 = vld [vmem:[#allocation7 + $0x1d0] sm:$0xff]
    %v1966 = vld [vmem:[#allocation7 + $0x1d8] sm:$0xff]
    %v1967 = vld [vmem:[#allocation7 + $0x1e0] sm:$0xff]
    %v1968 = vld [vmem:[#allocation7 + $0x1e8] sm:$0xff]
    %v1969 = vld [vmem:[#allocation7 + $0x1f0] sm:$0xff]
    %v1970 = vld [vmem:[#allocation7 + $0x1f8] sm:$0xff]
    %v2035 = vunpack.c.l.b16 %v1907
    %v2036 = vunpack.c.h.b16 %v1907
    %v2037 = vunpack.c.l.b16 %v1908
    %v2038 = vunpack.c.h.b16 %v1908
    %v2039 = vunpack.c.l.b16 %v1909
    %v2040 = vunpack.c.h.b16 %v1909
    %v2041 = vunpack.c.l.b16 %v1910
    %v2042 = vunpack.c.h.b16 %v1910
    %v2043 = vunpack.c.l.b16 %v1911
    %v2044 = vunpack.c.h.b16 %v1911
    %v2045 = vunpack.c.l.b16 %v1912
    %v2046 = vunpack.c.h.b16 %v1912
    %v2047 = vunpack.c.l.b16 %v1913
    %v2048 = vunpack.c.h.b16 %v1913
    %v2049 = vunpack.c.l.b16 %v1914
    %v2050 = vunpack.c.h.b16 %v1914
    %v2051 = vunpack.c.l.b16 %v1915
    %v2052 = vunpack.c.h.b16 %v1915
    %v2053 = vunpack.c.l.b16 %v1916
    %v2054 = vunpack.c.h.b16 %v1916
    %v2055 = vunpack.c.l.b16 %v1917
    %v2056 = vunpack.c.h.b16 %v1917
    %v2057 = vunpack.c.l.b16 %v1918
    %v2058 = vunpack.c.h.b16 %v1918
    %v2059 = vunpack.c.l.b16 %v1919
    %v2060 = vunpack.c.h.b16 %v1919
    %v2061 = vunpack.c.l.b16 %v1920
    %v2062 = vunpack.c.h.b16 %v1920
    %v2063 = vunpack.c.l.b16 %v1921
    %v2064 = vunpack.c.h.b16 %v1921
    %v2065 = vunpack.c.l.b16 %v1922
    %v2066 = vunpack.c.h.b16 %v1922
    %v2067 = vunpack.c.l.b16 %v1923
    %v2068 = vunpack.c.h.b16 %v1923
    %v2069 = vunpack.c.l.b16 %v1924
    %v2070 = vunpack.c.h.b16 %v1924
    %v2071 = vunpack.c.l.b16 %v1925
    %v2072 = vunpack.c.h.b16 %v1925
    %v2073 = vunpack.c.l.b16 %v1926
    %v2074 = vunpack.c.h.b16 %v1926
    %v2075 = vunpack.c.l.b16 %v1927
    %v2076 = vunpack.c.h.b16 %v1927
    %v2077 = vunpack.c.l.b16 %v1928
    %v2078 = vunpack.c.h.b16 %v1928
    %v2079 = vunpack.c.l.b16 %v1929
    %v2080 = vunpack.c.h.b16 %v1929
    %v2081 = vunpack.c.l.b16 %v1930
    %v2082 = vunpack.c.h.b16 %v1930
    %v2083 = vunpack.c.l.b16 %v1931
    %v2084 = vunpack.c.h.b16 %v1931
    %v2085 = vunpack.c.l.b16 %v1932
    %v2086 = vunpack.c.h.b16 %v1932
    %v2087 = vunpack.c.l.b16 %v1933
    %v2088 = vunpack.c.h.b16 %v1933
    %v2089 = vunpack.c.l.b16 %v1934
    %v2090 = vunpack.c.h.b16 %v1934
    %v2091 = vunpack.c.l.b16 %v1935
    %v2092 = vunpack.c.h.b16 %v1935
    %v2093 = vunpack.c.l.b16 %v1936
    %v2094 = vunpack.c.h.b16 %v1936
    %v2095 = vunpack.c.l.b16 %v1937
    %v2096 = vunpack.c.h.b16 %v1937
    %v2097 = vunpack.c.l.b16 %v1938
    %v2098 = vunpack.c.h.b16 %v1938
    %v2099 = vunpack.c.l.b16 %v1939
    %v2100 = vunpack.c.h.b16 %v1939
    %v2101 = vunpack.c.l.b16 %v1940
    %v2102 = vunpack.c.h.b16 %v1940
    %v2103 = vunpack.c.l.b16 %v1941
    %v2104 = vunpack.c.h.b16 %v1941
    %v2105 = vunpack.c.l.b16 %v1942
    %v2106 = vunpack.c.h.b16 %v1942
    %v2107 = vunpack.c.l.b16 %v1943
    %v2108 = vunpack.c.h.b16 %v1943
    %v2109 = vunpack.c.l.b16 %v1944
    %v2110 = vunpack.c.h.b16 %v1944
    %v2111 = vunpack.c.l.b16 %v1945
    %v2112 = vunpack.c.h.b16 %v1945
    %v2113 = vunpack.c.l.b16 %v1946
    %v2114 = vunpack.c.h.b16 %v1946
    %v2115 = vunpack.c.l.b16 %v1947
    %v2116 = vunpack.c.h.b16 %v1947
    %v2117 = vunpack.c.l.b16 %v1948
    %v2118 = vunpack.c.h.b16 %v1948
    %v2119 = vunpack.c.l.b16 %v1949
    %v2120 = vunpack.c.h.b16 %v1949
    %v2121 = vunpack.c.l.b16 %v1950
    %v2122 = vunpack.c.h.b16 %v1950
    %v2123 = vunpack.c.l.b16 %v1951
    %v2124 = vunpack.c.h.b16 %v1951
    %v2125 = vunpack.c.l.b16 %v1952
    %v2126 = vunpack.c.h.b16 %v1952
    %v2127 = vunpack.c.l.b16 %v1953
    %v2128 = vunpack.c.h.b16 %v1953
    %v2129 = vunpack.c.l.b16 %v1954
    %v2130 = vunpack.c.h.b16 %v1954
    %v2131 = vunpack.c.l.b16 %v1955
    %v2132 = vunpack.c.h.b16 %v1955
    %v2133 = vunpack.c.l.b16 %v1956
    %v2134 = vunpack.c.h.b16 %v1956
    %v2135 = vunpack.c.l.b16 %v1957
    %v2136 = vunpack.c.h.b16 %v1957
    %v2137 = vunpack.c.l.b16 %v1958
    %v2138 = vunpack.c.h.b16 %v1958
    %v2139 = vunpack.c.l.b16 %v1959
    %v2140 = vunpack.c.h.b16 %v1959
    %v2141 = vunpack.c.l.b16 %v1960
    %v2142 = vunpack.c.h.b16 %v1960
    %v2143 = vunpack.c.l.b16 %v1961
    %v2144 = vunpack.c.h.b16 %v1961
    %v2145 = vunpack.c.l.b16 %v1962
    %v2146 = vunpack.c.h.b16 %v1962
    %v2147 = vunpack.c.l.b16 %v1963
    %v2148 = vunpack.c.h.b16 %v1963
    %v2149 = vunpack.c.l.b16 %v1964
    %v2150 = vunpack.c.h.b16 %v1964
    %v2151 = vunpack.c.l.b16 %v1965
    %v2152 = vunpack.c.h.b16 %v1965
    %v2153 = vunpack.c.l.b16 %v1966
    %v2154 = vunpack.c.h.b16 %v1966
    %v2155 = vunpack.c.l.b16 %v1967
    %v2156 = vunpack.c.h.b16 %v1967
    %v2157 = vunpack.c.l.b16 %v1968
    %v2158 = vunpack.c.h.b16 %v1968
    %v2159 = vunpack.c.l.b16 %v1969
    %v2160 = vunpack.c.h.b16 %v1969
    %v2161 = vunpack.c.l.b16 %v1970
    %v2162 = vunpack.c.h.b16 %v1970
    %v2163 = vpack.c.b16 %v2037, %v2035
    %v2164 = vpack.c.b16 %v2038, %v2036
    %v2165 = vpack.c.b16 %v2041, %v2039
    %v2166 = vpack.c.b16 %v2042, %v2040
    %v2167 = vpack.c.b16 %v2045, %v2043
    %v2168 = vpack.c.b16 %v2046, %v2044
    %v2169 = vpack.c.b16 %v2049, %v2047
    %v2170 = vpack.c.b16 %v2050, %v2048
    %v2171 = vpack.c.b16 %v2053, %v2051
    %v2172 = vpack.c.b16 %v2054, %v2052
    %v2173 = vpack.c.b16 %v2057, %v2055
    %v2174 = vpack.c.b16 %v2058, %v2056
    %v2175 = vpack.c.b16 %v2061, %v2059
    %v2176 = vpack.c.b16 %v2062, %v2060
    %v2177 = vpack.c.b16 %v2065, %v2063
    %v2178 = vpack.c.b16 %v2066, %v2064
    %v2179 = vpack.c.b16 %v2069, %v2067
    %v2180 = vpack.c.b16 %v2070, %v2068
    %v2181 = vpack.c.b16 %v2073, %v2071
    %v2182 = vpack.c.b16 %v2074, %v2072
    %v2183 = vpack.c.b16 %v2077, %v2075
    %v2184 = vpack.c.b16 %v2078, %v2076
    %v2185 = vpack.c.b16 %v2081, %v2079
    %v2186 = vpack.c.b16 %v2082, %v2080
    %v2187 = vpack.c.b16 %v2085, %v2083
    %v2188 = vpack.c.b16 %v2086, %v2084
    %v2189 = vpack.c.b16 %v2089, %v2087
    %v2190 = vpack.c.b16 %v2090, %v2088
    %v2191 = vpack.c.b16 %v2093, %v2091
    %v2192 = vpack.c.b16 %v2094, %v2092
    %v2193 = vpack.c.b16 %v2097, %v2095
    %v2194 = vpack.c.b16 %v2098, %v2096
    %v2195 = vpack.c.b16 %v2101, %v2099
    %v2196 = vpack.c.b16 %v2102, %v2100
    %v2197 = vpack.c.b16 %v2105, %v2103
    %v2198 = vpack.c.b16 %v2106, %v2104
    %v2199 = vpack.c.b16 %v2109, %v2107
    %v2200 = vpack.c.b16 %v2110, %v2108
    %v2201 = vpack.c.b16 %v2113, %v2111
    %v2202 = vpack.c.b16 %v2114, %v2112
    %v2203 = vpack.c.b16 %v2117, %v2115
    %v2204 = vpack.c.b16 %v2118, %v2116
    %v2205 = vpack.c.b16 %v2121, %v2119
    %v2206 = vpack.c.b16 %v2122, %v2120
    %v2207 = vpack.c.b16 %v2125, %v2123
    %v2208 = vpack.c.b16 %v2126, %v2124
    %v2209 = vpack.c.b16 %v2129, %v2127
    %v2210 = vpack.c.b16 %v2130, %v2128
    %v2211 = vpack.c.b16 %v2133, %v2131
    %v2212 = vpack.c.b16 %v2134, %v2132
    %v2213 = vpack.c.b16 %v2137, %v2135
    %v2214 = vpack.c.b16 %v2138, %v2136
    %v2215 = vpack.c.b16 %v2141, %v2139
    %v2216 = vpack.c.b16 %v2142, %v2140
    %v2217 = vpack.c.b16 %v2145, %v2143
    %v2218 = vpack.c.b16 %v2146, %v2144
    %v2219 = vpack.c.b16 %v2149, %v2147
    %v2220 = vpack.c.b16 %v2150, %v2148
    %v2221 = vpack.c.b16 %v2153, %v2151
    %v2222 = vpack.c.b16 %v2154, %v2152
    %v2223 = vpack.c.b16 %v2157, %v2155
    %v2224 = vpack.c.b16 %v2158, %v2156
    %v2225 = vpack.c.b16 %v2161, %v2159
    %v2226 = vpack.c.b16 %v2162, %v2160
    %2291 = vmatprep.subr.bf16.mxu0 %v2164
    %2292 = vmatpush1.bf16.msra.mxu0 %v2163
    %2293 = vmatprep.subr.bf16.mxu0 %v2166
    %2294 = vmatpush1.bf16.msra.mxu0 %v2165
    %2295 = vmatprep.subr.bf16.mxu0 %v2168
    %2296 = vmatpush1.bf16.msra.mxu0 %v2167
    %2297 = vmatprep.subr.bf16.mxu0 %v2170
    %2298 = vmatpush1.bf16.msra.mxu0 %v2169
    %2299 = vmatprep.subr.bf16.mxu0 %v2172
    %2300 = vmatpush1.bf16.msra.mxu0 %v2171
    %2301 = vmatprep.subr.bf16.mxu0 %v2174
    %2302 = vmatpush1.bf16.msra.mxu0 %v2173
    %2303 = vmatprep.subr.bf16.mxu0 %v2176
    %2304 = vmatpush1.bf16.msra.mxu0 %v2175
    %2305 = vmatprep.subr.bf16.mxu0 %v2178
    %2306 = vmatpush1.bf16.msra.mxu0 %v2177
    %2307 = vmatprep.subr.bf16.mxu0 %v2180
    %2308 = vmatpush1.bf16.msra.mxu0 %v2179
    %2309 = vmatprep.subr.bf16.mxu0 %v2182
    %2310 = vmatpush1.bf16.msra.mxu0 %v2181
    %2311 = vmatprep.subr.bf16.mxu0 %v2184
    %2312 = vmatpush1.bf16.msra.mxu0 %v2183
    %2313 = vmatprep.subr.bf16.mxu0 %v2186
    %2314 = vmatpush1.bf16.msra.mxu0 %v2185
    %2315 = vmatprep.subr.bf16.mxu0 %v2188
    %2316 = vmatpush1.bf16.msra.mxu0 %v2187
    %2317 = vmatprep.subr.bf16.mxu0 %v2190
    %2318 = vmatpush1.bf16.msra.mxu0 %v2189
    %2319 = vmatprep.subr.bf16.mxu0 %v2192
    %2320 = vmatpush1.bf16.msra.mxu0 %v2191
    %2321 = vmatprep.subr.bf16.mxu0 %v2194
    %2322 = vmatpush1.bf16.msra.mxu0 %v2193
    %2323 = vmatprep.mubr.bf16.mxu0 %v1904
    %2324 = vmatmul.mubr.bf16.gmra.mrb[0].mxu0 %v1903
    %v2325 = vpop.f32.mrb[0].mxu0
    %v2326 = vadd.f32 %v213, %v2325
    %v2327 = vpop.f32.mrb[0].mxu0
    %v2328 = vadd.f32 %v214, %v2327
    %v2329 = vpop.f32.mrb[0].mxu0
    %v2330 = vpop.f32.mrb[0].mxu0
    %2331 = vdwg.mxu0
    %2332 = vmatprep.subr.bf16.mxu0 %v2196
    %2333 = vmatpush1.bf16.msra.mxu0 %v2195
    %2334 = vmatprep.subr.bf16.mxu0 %v2198
    %2335 = vmatpush1.bf16.msra.mxu0 %v2197
    %2336 = vmatprep.subr.bf16.mxu0 %v2200
    %2337 = vmatpush1.bf16.msra.mxu0 %v2199
    %2338 = vmatprep.subr.bf16.mxu0 %v2202
    %2339 = vmatpush1.bf16.msra.mxu0 %v2201
    %2340 = vmatprep.subr.bf16.mxu0 %v2204
    %2341 = vmatpush1.bf16.msra.mxu0 %v2203
    %2342 = vmatprep.subr.bf16.mxu0 %v2206
    %2343 = vmatpush1.bf16.msra.mxu0 %v2205
    %2344 = vmatprep.subr.bf16.mxu0 %v2208
    %2345 = vmatpush1.bf16.msra.mxu0 %v2207
    %2346 = vmatprep.subr.bf16.mxu0 %v2210
    %2347 = vmatpush1.bf16.msra.mxu0 %v2209
    %2348 = vmatprep.subr.bf16.mxu0 %v2212
    %2349 = vmatpush1.bf16.msra.mxu0 %v2211
    %2350 = vmatprep.subr.bf16.mxu0 %v2214
    %2351 = vmatpush1.bf16.msra.mxu0 %v2213
    %2352 = vmatprep.subr.bf16.mxu0 %v2216
    %2353 = vmatpush1.bf16.msra.mxu0 %v2215
    %2354 = vmatprep.subr.bf16.mxu0 %v2218
    %2355 = vmatpush1.bf16.msra.mxu0 %v2217
    %2356 = vmatprep.subr.bf16.mxu0 %v2220
    %2357 = vmatpush1.bf16.msra.mxu0 %v2219
    %2358 = vmatprep.subr.bf16.mxu0 %v2222
    %2359 = vmatpush1.bf16.msra.mxu0 %v2221
    %2360 = vmatprep.subr.bf16.mxu0 %v2224
    %2361 = vmatpush1.bf16.msra.mxu0 %v2223
    %2362 = vmatprep.subr.bf16.mxu0 %v2226
    %2363 = vmatpush1.bf16.msra.mxu0 %v2225
    %2364 = vmatprep.mubr.bf16.mxu0 %v1906
    %2365 = vmatmul.mubr.bf16.gmra.mrb[0].mxu0 %v1905
    %v2366 = vpop.f32.mrb[0].mxu0
    %v2367 = vadd.f32 %v2326, %v2366
    %v2368 = vpop.f32.mrb[0].mxu0
    %v2369 = vadd.f32 %v2328, %v2368
    %v2370 = vpop.f32.mrb[0].mxu0
    %v2371 = vpop.f32.mrb[0].mxu0
    %2372 = vdwg.mxu0
    %v2373 = vmax.f32 %v2367, 0.0
    %v2374 = vmax.f32 %v2369, 0.0
    %v2375 = vpack.c.bf16 %v2373, %v2373
    %v2376 = vpack.c.bf16 %v2374, %v2374
    %v2377 = vld [vmem:[#allocation9] sm:$0xf]
    %v2378 = vld [vmem:[#allocation9 + $0x4] sm:$0xf]
    %v2379 = vld [vmem:[#allocation9 + $0x8] sm:$0xf]
    %v2380 = vld [vmem:[#allocation9 + $0xc] sm:$0xf]
    %v2381 = vld [vmem:[#allocation9 + $0x10] sm:$0xf]
    %v2382 = vld [vmem:[#allocation9 + $0x14] sm:$0xf]
    %v2383 = vld [vmem:[#allocation9 + $0x18] sm:$0xf]
    %v2384 = vld [vmem:[#allocation9 + $0x1c] sm:$0xf]
    %v2385 = vld [vmem:[#allocation9 + $0x20] sm:$0xf]
    %v2386 = vld [vmem:[#allocation9 + $0x24] sm:$0xf]
    %v2387 = vld [vmem:[#allocation9 + $0x28] sm:$0xf]
    %v2388 = vld [vmem:[#allocation9 + $0x2c] sm:$0xf]
    %v2389 = vld [vmem:[#allocation9 + $0x30] sm:$0xf]
    %v2390 = vld [vmem:[#allocation9 + $0x34] sm:$0xf]
    %v2391 = vld [vmem:[#allocation9 + $0x38] sm:$0xf]
    %v2392 = vld [vmem:[#allocation9 + $0x3c] sm:$0xf]
    %v2393 = vld [vmem:[#allocation9 + $0x40] sm:$0xf]
    %v2394 = vld [vmem:[#allocation9 + $0x44] sm:$0xf]
    %v2395 = vld [vmem:[#allocation9 + $0x48] sm:$0xf]
    %v2396 = vld [vmem:[#allocation9 + $0x4c] sm:$0xf]
    %v2397 = vld [vmem:[#allocation9 + $0x50] sm:$0xf]
    %v2398 = vld [vmem:[#allocation9 + $0x54] sm:$0xf]
    %v2399 = vld [vmem:[#allocation9 + $0x58] sm:$0xf]
    %v2400 = vld [vmem:[#allocation9 + $0x5c] sm:$0xf]
    %v2401 = vld [vmem:[#allocation9 + $0x60] sm:$0xf]
    %v2402 = vld [vmem:[#allocation9 + $0x64] sm:$0xf]
    %v2403 = vld [vmem:[#allocation9 + $0x68] sm:$0xf]
    %v2404 = vld [vmem:[#allocation9 + $0x6c] sm:$0xf]
    %v2405 = vld [vmem:[#allocation9 + $0x70] sm:$0xf]
    %v2406 = vld [vmem:[#allocation9 + $0x74] sm:$0xf]
    %v2407 = vld [vmem:[#allocation9 + $0x78] sm:$0xf]
    %v2408 = vld [vmem:[#allocation9 + $0x7c] sm:$0xf]
    %v2441 = vunpack.c.l.b16 %v2377
    %v2442 = vunpack.c.l.b16 %v2378
    %v2443 = vunpack.c.l.b16 %v2379
    %v2444 = vunpack.c.l.b16 %v2380
    %v2445 = vunpack.c.l.b16 %v2381
    %v2446 = vunpack.c.l.b16 %v2382
    %v2447 = vunpack.c.l.b16 %v2383
    %v2448 = vunpack.c.l.b16 %v2384
    %v2449 = vunpack.c.l.b16 %v2385
    %v2450 = vunpack.c.l.b16 %v2386
    %v2451 = vunpack.c.l.b16 %v2387
    %v2452 = vunpack.c.l.b16 %v2388
    %v2453 = vunpack.c.l.b16 %v2389
    %v2454 = vunpack.c.l.b16 %v2390
    %v2455 = vunpack.c.l.b16 %v2391
    %v2456 = vunpack.c.l.b16 %v2392
    %v2457 = vunpack.c.l.b16 %v2393
    %v2458 = vunpack.c.l.b16 %v2394
    %v2459 = vunpack.c.l.b16 %v2395
    %v2460 = vunpack.c.l.b16 %v2396
    %v2461 = vunpack.c.l.b16 %v2397
    %v2462 = vunpack.c.l.b16 %v2398
    %v2463 = vunpack.c.l.b16 %v2399
    %v2464 = vunpack.c.l.b16 %v2400
    %v2465 = vunpack.c.l.b16 %v2401
    %v2466 = vunpack.c.l.b16 %v2402
    %v2467 = vunpack.c.l.b16 %v2403
    %v2468 = vunpack.c.l.b16 %v2404
    %v2469 = vunpack.c.l.b16 %v2405
    %v2470 = vunpack.c.l.b16 %v2406
    %v2471 = vunpack.c.l.b16 %v2407
    %v2472 = vunpack.c.l.b16 %v2408
    %v2473 = vpack.c.b16 %v2442, %v2441
    %v2474 = vpack.c.b16 %v2444, %v2443
    %v2475 = vpack.c.b16 %v2446, %v2445
    %v2476 = vpack.c.b16 %v2448, %v2447
    %v2477 = vpack.c.b16 %v2450, %v2449
    %v2478 = vpack.c.b16 %v2452, %v2451
    %v2479 = vpack.c.b16 %v2454, %v2453
    %v2480 = vpack.c.b16 %v2456, %v2455
    %v2481 = vpack.c.b16 %v2458, %v2457
    %v2482 = vpack.c.b16 %v2460, %v2459
    %v2483 = vpack.c.b16 %v2462, %v2461
    %v2484 = vpack.c.b16 %v2464, %v2463
    %v2485 = vpack.c.b16 %v2466, %v2465
    %v2486 = vpack.c.b16 %v2468, %v2467
    %v2487 = vpack.c.b16 %v2470, %v2469
    %v2488 = vpack.c.b16 %v2472, %v2471
    %2505 = vmatprep.subr.bf16.mxu0 0
    %2506 = vmatpush1.bf16.msra.mxu0 %v2473
    %2507 = vmatprep.subr.bf16.mxu0 0
    %2508 = vmatpush1.bf16.msra.mxu0 %v2474
    %2509 = vmatprep.subr.bf16.mxu0 0
    %2510 = vmatpush1.bf16.msra.mxu0 %v2475
    %2511 = vmatprep.subr.bf16.mxu0 0
    %2512 = vmatpush1.bf16.msra.mxu0 %v2476
    %2513 = vmatprep.subr.bf16.mxu0 0
    %2514 = vmatpush1.bf16.msra.mxu0 %v2477
    %2515 = vmatprep.subr.bf16.mxu0 0
    %2516 = vmatpush1.bf16.msra.mxu0 %v2478
    %2517 = vmatprep.subr.bf16.mxu0 0
    %2518 = vmatpush1.bf16.msra.mxu0 %v2479
    %2519 = vmatprep.subr.bf16.mxu0 0
    %2520 = vmatpush1.bf16.msra.mxu0 %v2480
    %2521 = vmatprep.subr.bf16.mxu0 0
    %2522 = vmatpush1.bf16.msra.mxu0 %v2481
    %2523 = vmatprep.subr.bf16.mxu0 0
    %2524 = vmatpush1.bf16.msra.mxu0 %v2482
    %2525 = vmatprep.subr.bf16.mxu0 0
    %2526 = vmatpush1.bf16.msra.mxu0 %v2483
    %2527 = vmatprep.subr.bf16.mxu0 0
    %2528 = vmatpush1.bf16.msra.mxu0 %v2484
    %2529 = vmatprep.subr.bf16.mxu0 0
    %2530 = vmatpush1.bf16.msra.mxu0 %v2485
    %2531 = vmatprep.subr.bf16.mxu0 0
    %2532 = vmatpush1.bf16.msra.mxu0 %v2486
    %2533 = vmatprep.subr.bf16.mxu0 0
    %2534 = vmatpush1.bf16.msra.mxu0 %v2487
    %2535 = vmatprep.subr.bf16.mxu0 0
    %2536 = vmatpush1.bf16.msra.mxu0 %v2488
    %2537 = vmatprep.mubr.bf16.mxu0 %v2376
    %2538 = vmatmul.mubr.bf16.gmra.mrb[0].mxu0 %v2375
    %v2539 = vpop.f32.mrb[0].mxu0
    %v2540 = vadd.f32 %v215, %v2539
    %v2541 = vpop.f32.mrb[0].mxu0
    %v2542 = vpop.f32.mrb[0].mxu0
    %v2543 = vpop.f32.mrb[0].mxu0
    %2544 = vdwg.mxu0
    %v2545 = vmax.f32 %v2540, 0.0
    %v2546 = vld [vmem:[%s7] sm:$0xff]
    %v2547 = vlaneseq
    %v2548 = vshrl.u32 %v2547, 7
    %v2549 = vsub.s32 0, %v2548
    %v2550 = vrot.slane %v2546, %v2549
    %v2551 = vmul.f32 %v2545, %v2550
    %2552 = vadd.xlane.f32.xlu0 %v2551
    %v2553 = vpop.xlane.xlu0 %2552
    %v2554 = vadd.f32 %v2553, %v216
    %v2555 = vlaneseq
    %v2556 = vshrl.u32 %v2555, 7
    %v2557 = vsub.s32 1, %v2556
    %v2558 = vrot.slane %v2546, %v2557
    %v2559 = vmul.f32 %v2545, %v2558
    %2560 = vadd.xlane.f32.xlu0 %v2559
    %v2561 = vpop.xlane.xlu0 %2560
    %v2562 = vadd.f32 %v2561, %v216
    %v2563 = vxor.u32 %v2562, 2147483648
    %v2564 = vmul.f32 %v2563, 1.442695
    %v2565 = vpow.pop %v2564
    %v2566 = vadd.f32 %v2565, 1.0
    %v2567 = vrcp.pop %v2566
    %v2568 = vmul.f32 1.0, %v2567
    %v2569 = vxor.u32 %v2554, 2147483648
    %v2570 = vmul.f32 %v2569, 1.442695
    %v2571 = vpow.pop %v2570
    %v2572 = vadd.f32 %v2571, 1.0
    %v2573 = vrcp.pop %v2572
    %v2574 = vmul.f32 1.0, %v2573
    %2576 = vrot.lane.b32.xlu0 %v2574, 1
    %v2577 = vpop.permute.xlu0 %2576
    %v2579 = vmul.f32 %v2568, %v2577
    %vm2580 = vcmp.eq.s32.totalorder %v112, 0
    %v2581 = vsel %vm2580, 1, 0
    %vm2582 = vcmp.eq.s32.totalorder %v2581, 1
    %2584 = vset.pattern.permute.xlu0 0
    %2585 = vperm.xlu0 %2584, %v2554
    %v2586 = vpop.permute.xlu0 %2585
    %v2588 = vsel %vm2582, %v2586, 0.0
    %vm2589 = vcmp.eq.s32.totalorder %v112, 1
    %v2590 = vsel %vm2589, 1, 0
    %vm2591 = vcmp.eq.s32.totalorder %v2590, 1
    %2593 = vset.pattern.permute.xlu0 1
    %2594 = vperm.xlu0 %2593, %v2562
    %v2595 = vpop.permute.xlu0 %2594
    %v2597 = vsel %vm2591, %v2595, 0.0
    %v2598 = vadd.f32 %v2588, %v2597
    %vm2599 = vcmp.eq.s32.totalorder %v112, 2
    %v2600 = vsel %vm2599, 1, 0
    %vm2601 = vcmp.eq.s32.totalorder %v2600, 1
    %2603 = vset.pattern.permute.xlu0 1
    %2604 = vperm.xlu0 %2603, %v2579
    %v2605 = vpop.permute.xlu0 %2604
    %v2607 = vsel %vm2601, %v2605, 0.0
    %v2608 = vadd.f32 %v2598, %v2607
    %2609 = vst [vmem:[%s8] sm:$0xff] %v2608
    // Predicated region
    $region58: #{_esmm_forward.1} parent=1 // pred_check
      _
    $region59: #{_esmm_forward.1} parent=1 // pred_check_branch
      %2611 = sbr.rel (0) target = $region61
    $region60: #{_esmm_forward.1} parent=1 // pred_region
      _
    $region61: #{_esmm_forward.1} parent=1 // pred_fallthru
      _
    // Predicated region
    $region62: #{_esmm_forward.1} parent=1 // pred_check
      _
    $region63: #{_esmm_forward.1} parent=1 // pred_check_branch
      %2613 = sbr.rel (0) target = $region65
    $region64: #{_esmm_forward.1} parent=1 // pred_region
      _
    $region65: #{_esmm_forward.1} parent=1 // pred_fallthru
      _
    %2614 = vsyncpa [#allocation3], 1
    %2615 = vsyncpa [#allocation5], 1
    %2616 = vsyncpa [#allocation8], 1
    %2617 = vsyncpa [#allocation11], 1

</llo_original>
